<compile_context>
chip_gen: v7x
topology: tpu7x:2x2x1
jax: 0.10.0
libtpu: 0.0.40
codegen_flags: <defaults>
</compile_context>

<pallas_src>
import functools

import jax
import jax.numpy as jnp
from jax.experimental import pallas as pl
from jax.experimental.pallas import tpu as pltpu


def _round_up(n, m):
    return ((n + m - 1) // m) * m


def _mlp_kernel(num_hidden, n_drop, dropout_input, use_bf16, *refs):
    """One batch tile: [dropout] -> (Linear -> ReLU -> dropout)* -> Linear -> BCE partials.

    refs = (x, y, elem_mask, drop_masks..., W0, b0, ..., W_out, b_out,
            logits_out, loss_parts_out)
    """
    idx = 0
    x_ref = refs[idx]; idx += 1
    y_ref = refs[idx]; idx += 1
    m_ref = refs[idx]; idx += 1
    drop_refs = refs[idx:idx + n_drop]; idx += n_drop
    param_refs = refs[idx:idx + 2 * (num_hidden + 1)]; idx += 2 * (num_hidden + 1)
    logits_ref, loss_ref = refs[idx], refs[idx + 1]

    compute_dtype = jnp.bfloat16 if use_bf16 else jnp.float32

    h = x_ref[...].astype(jnp.float32)

    d = 0
    if n_drop and dropout_input:
        h = h * drop_refs[d][...]           # pre-scaled keep mask (0 or 1/(1-p))
        d += 1

    # hidden layers (Python loop unrolls at trace time)
    for i in range(num_hidden):
        w = param_refs[2 * i][...]
        b = param_refs[2 * i + 1][...]      # (1, N) f32, broadcasts over batch rows
        h = jnp.dot(h.astype(compute_dtype), w,
                    preferred_element_type=jnp.float32) + b
        h = jnp.maximum(h, 0.0)             # ReLU; elementwise stays f32 (v5e has no bf16 VPU)
        if n_drop:
            h = h * drop_refs[d][...]
            d += 1

    # output layer (lane-dense padded logits)
    w_out = param_refs[-2][...]
    b_out = param_refs[-1][...]
    logits = jnp.dot(h.astype(compute_dtype), w_out,
                     preferred_element_type=jnp.float32) + b_out
    logits_ref[...] = logits

    # numerically stable BCE-with-logits, masked to valid (row, col) elements;
    # exp/log form keeps the lowering to plain EUP ops.
    y = y_ref[...]
    z = logits
    per = jnp.maximum(z, 0.0) - z * y + jnp.log(1.0 + jnp.exp(-jnp.abs(z)))
    per = per * m_ref[...]
    col_sums = jnp.sum(per, axis=0, keepdims=True)          # (1, OP) sublane reduce
    loss_ref[...] = jnp.broadcast_to(col_sums, loss_ref.shape)


def make_dropout_masks(key, batch, params, p, dropout_input=True):
    """Float multiplier masks (0 or 1/(1-p)): input mask (optional) + one per hidden layer."""
    dims = []
    if dropout_input:
        dims.append(params[0][0].shape[0])              # num_features
    dims += [w.shape[1] for (w, _) in params[:-1]]      # hidden sizes
    scale = 0.0 if p >= 1.0 else 1.0 / (1.0 - p)        # guard p == 1.0
    masks = []
    for d in dims:
        key, k = jax.random.split(key)
        keep = jax.random.bernoulli(k, 1.0 - p, (batch, d))
        masks.append(keep.astype(jnp.float32) * jnp.float32(scale))
    return masks


def simple_mlp_forward(x, y, params, *, dropout_masks=None, dropout_input=True,
                       tile_b=128, use_bf16_matmul=True):
    """Pallas-TPU forward of SimpleMLP.

    params: [(W0, b0), ..., (W_out, b_out)] with W as (in, out), b as (out,)
            (same math as nn.Linear's x @ W.T + b with W stored transposed).
    dropout_masks: None (eval) or list from make_dropout_masks (training).
    Returns (logits[B, num_outputs], mean BCE-with-logits loss).
    """
    B, F = x.shape
    num_hidden = len(params) - 1
    O = params[-1][0].shape[1]
    training = dropout_masks is not None
    n_drop = len(dropout_masks) if training else 0
    if training:
        assert n_drop == num_hidden + (1 if dropout_input else 0)

    LANE = 128
    f32 = jnp.float32
    w_dtype = jnp.bfloat16 if use_bf16_matmul else f32

    # 128-aligned feature dims keep every matmul MXU-shaped; zero padding is exact.
    dims = [F] + [w.shape[1] for (w, _) in params]
    dims_p = [_round_up(d, LANE) for d in dims]
    OP = dims_p[-1]

    tile_b = _round_up(max(8, min(tile_b, _round_up(B, 8))), 8)
    B_pad = _round_up(B, tile_b)
    n_tiles = B_pad // tile_b

    # ---- pad / cast operands on the host side ----
    xp = jnp.zeros((B_pad, dims_p[0]), f32).at[:B, :F].set(x.astype(f32))
    yp = jnp.zeros((B_pad, OP), f32).at[:B, :O].set(y.astype(f32))
    elem_mask = jnp.zeros((B_pad, OP), f32).at[:B, :O].set(1.0)

    flat_params = []
    for li, (w, b) in enumerate(params):
        kin, kout = dims_p[li], dims_p[li + 1]
        wp = jnp.zeros((kin, kout), f32).at[:w.shape[0], :w.shape[1]].set(w.astype(f32))
        bp = jnp.zeros((1, kout), f32).at[0, :w.shape[1]].set(jnp.reshape(b, (-1,)).astype(f32))
        flat_params += [wp.astype(w_dtype), bp]

    drop_p = []
    if training:
        mask_dims = ([dims_p[0]] if dropout_input else []) + dims_p[1:-1]
        for m, dp in zip(dropout_masks, mask_dims):
            mp = jnp.zeros((B_pad, dp), f32).at[:m.shape[0], :m.shape[1]].set(m.astype(f32))
            drop_p.append(mp)

    # ---- BlockSpecs: batch-tiled streams + resident weights ----
    def row_spec(width):
        return pl.BlockSpec((tile_b, width), lambda i: (i, 0))

    def const_spec(shape):
        return pl.BlockSpec(shape, lambda i: (0, 0))

    in_specs = [row_spec(dims_p[0]),        # x
                row_spec(OP),               # y
                row_spec(OP)]               # element validity mask
    in_specs += [row_spec(m.shape[1]) for m in drop_p]
    in_specs += [const_spec(t.shape) for t in flat_params]

    out_specs = (pl.BlockSpec((tile_b, OP), lambda i: (i, 0)),   # logits (lane-dense)
                 pl.BlockSpec((8, OP), lambda i: (i, 0)))        # per-tile loss partials
    out_shape = (jax.ShapeDtypeStruct((B_pad, OP), f32),
                 jax.ShapeDtypeStruct((n_tiles * 8, OP), f32))

    # ---- VMEM budget + cost estimate ----
    def nbytes(a):
        return a.size * a.dtype.itemsize

    tiled = [xp, yp, elem_mask] + drop_p
    block_bytes = sum(a.dtype.itemsize * tile_b * a.shape[1] for a in tiled)
    block_bytes += 4 * tile_b * OP + 4 * 8 * OP                     # logits + loss blocks
    resident_bytes = sum(nbytes(t) for t in flat_params)
    vmem_est = 2 * (block_bytes + resident_bytes)                   # conservative: 2x buffers
    vmem_limit = int(min(48 << 20, max(16 << 20, int(vmem_est * 1.5))))

    flops = 2 * B_pad * sum(dims_p[i] * dims_p[i + 1] for i in range(len(dims_p) - 1))
    bytes_accessed = int(sum(nbytes(a) for a in tiled) + resident_bytes
                         + 4 * B_pad * OP + 4 * n_tiles * 8 * OP)
    cost = pl.CostEstimate(flops=int(flops), transcendentals=int(2 * B_pad * OP),
                           bytes_accessed=bytes_accessed)

    kernel = functools.partial(_mlp_kernel, num_hidden, n_drop, dropout_input,
                               use_bf16_matmul)

    logits_pad, loss_parts = pl.pallas_call(
        kernel,
        out_shape=out_shape,
        grid=(n_tiles,),
        in_specs=in_specs,
        out_specs=out_specs,
        compiler_params=pltpu.CompilerParams(
            dimension_semantics=("parallel",),   # batch tiles shard across TCs on v7x
            vmem_limit_bytes=vmem_limit),
        cost_estimate=cost,
    )(xp, yp, elem_mask, *drop_p, *flat_params)

    logits = logits_pad[:B, :O]
    loss = jnp.sum(loss_parts[0::8, :]) / jnp.float32(B * O)
    return logits, loss


def init_params(key, num_features, hidden_layer_sizes, num_outputs):
    """nn.Linear-style init: uniform(-1/sqrt(in), 1/sqrt(in)); W stored (in, out)."""
    params = []
    d = num_features
    for ld in list(hidden_layer_sizes) + [num_outputs]:
        key, kw, kb = jax.random.split(key, 3)
        bound = 1.0 / (d ** 0.5)
        w = jax.random.uniform(kw, (d, ld), jnp.float32, -bound, bound)
        b = jax.random.uniform(kb, (ld,), jnp.float32, -bound, bound)
        params.append((w, b))
        d = ld
    return params


def _reference_forward(x, y, params, dropout_masks=None, dropout_input=True):
    """Pure-JAX reference of the forward (same masks -> deterministic training check)."""
    h = x.astype(jnp.float32)
    d = 0
    if dropout_masks is not None and dropout_input:
        h = h * dropout_masks[d]; d += 1
    for (w, b) in params[:-1]:
        h = jnp.maximum(h @ w + jnp.reshape(b, (1, -1)), 0.0)
        if dropout_masks is not None:
            h = h * dropout_masks[d]; d += 1
    w, b = params[-1]
    logits = h @ w + jnp.reshape(b, (1, -1))
    z = logits
    yf = y.astype(jnp.float32)
    per = jnp.maximum(z, 0.0) - z * yf + jnp.log(1.0 + jnp.exp(-jnp.abs(z)))
    return logits, jnp.mean(per)


if __name__ == "__main__":
    # Small but MXU/tile-friendly shapes: batch=256 (2 tiles of 128), features=64,
    # hidden=[128, 128], num_outputs=8 (padded to 128 lanes inside the kernel).
    B, F, HIDDEN, O = 256, 64, [128, 128], 8
    key = jax.random.PRNGKey(0)
    kx, ky, kp, kd = jax.random.split(key, 4)

    x = jax.random.normal(kx, (B, F), jnp.float32)
    y = (jax.random.uniform(ky, (B, O)) > 0.5).astype(jnp.float32)
    params = init_params(kp, F, HIDDEN, O)

    # 1) eval mode (dropout identity), f32 matmuls vs pure-JAX reference.
    logits, loss = simple_mlp_forward(x, y, params, use_bf16_matmul=False)
    jax.block_until_ready((logits, loss))
    ref_logits, ref_loss = _reference_forward(x, y, params)
    assert jnp.allclose(logits, ref_logits, atol=2e-2, rtol=2e-2)
    assert jnp.allclose(loss, ref_loss, atol=2e-2, rtol=2e-2)

    # 2) training mode: deterministic host-generated dropout masks applied in-kernel.
    masks = make_dropout_masks(kd, B, params, p=0.5, dropout_input=True)
    logits_tr, loss_tr = simple_mlp_forward(x, y, params, dropout_masks=masks,
                                            use_bf16_matmul=False)
    jax.block_until_ready((logits_tr, loss_tr))
    ref_logits_tr, ref_loss_tr = _reference_forward(x, y, params, dropout_masks=masks)
    assert jnp.allclose(logits_tr, ref_logits_tr, atol=2e-2, rtol=2e-2)
    assert jnp.allclose(loss_tr, ref_loss_tr, atol=2e-2, rtol=2e-2)
    assert bool(jnp.isfinite(loss_tr))

    # 3) default fast path: bf16 matmul operands (f32 accumulation) -> loose tolerance.
    logits_bf, loss_bf = simple_mlp_forward(x, y, params)  # use_bf16_matmul=True
    jax.block_until_ready((logits_bf, loss_bf))
    assert jnp.allclose(logits_bf, ref_logits, atol=1e-1, rtol=1e-1)
    assert bool(jnp.isfinite(loss_bf))

    print("KERNEL_OK")
</pallas_src>

<mosaic_0001>
module attributes {stable_mosaic.version = 11 : i64} {
  func.func @_mlp_kernel(%arg0: i32, %arg1: memref<128x128xf32, #tpu.memory_space<vmem>>, %arg2: memref<128x128xf32, #tpu.memory_space<vmem>>, %arg3: memref<128x128xf32, #tpu.memory_space<vmem>>, %arg4: memref<128x128xf32, #tpu.memory_space<vmem>>, %arg5: memref<1x128xf32, #tpu.memory_space<vmem>>, %arg6: memref<128x128xf32, #tpu.memory_space<vmem>>, %arg7: memref<1x128xf32, #tpu.memory_space<vmem>>, %arg8: memref<128x128xf32, #tpu.memory_space<vmem>>, %arg9: memref<1x128xf32, #tpu.memory_space<vmem>>, %arg10: memref<128x128xf32, #tpu.memory_space<vmem>>, %arg11: memref<8x128xf32, #tpu.memory_space<vmem>>) attributes {dimension_semantics = [#tpu.dimension_semantics<parallel>], iteration_bounds = array<i64: 2>, scalar_prefetch = 0 : i64, scratch_operands = 0 : i64, tpu.core_type = #tpu.core_type<tc>, window_params = [{transform_indices = @transform_0, window_bounds = array<i64: 128, 128>}, {transform_indices = @transform_1, window_bounds = array<i64: 128, 128>}, {transform_indices = @transform_2, window_bounds = array<i64: 128, 128>}, {pipeline_mode = #tpu.pipeline_mode<synchronous>, transform_indices = @transform_3, window_bounds = array<i64: 128, 128>}, {pipeline_mode = #tpu.pipeline_mode<synchronous>, transform_indices = @transform_4, window_bounds = array<i64: 1, 128>}, {pipeline_mode = #tpu.pipeline_mode<synchronous>, transform_indices = @transform_5, window_bounds = array<i64: 128, 128>}, {pipeline_mode = #tpu.pipeline_mode<synchronous>, transform_indices = @transform_6, window_bounds = array<i64: 1, 128>}, {pipeline_mode = #tpu.pipeline_mode<synchronous>, transform_indices = @transform_7, window_bounds = array<i64: 128, 128>}, {pipeline_mode = #tpu.pipeline_mode<synchronous>, transform_indices = @transform_8, window_bounds = array<i64: 1, 128>}, {transform_indices = @transform_9, window_bounds = array<i64: 128, 128>}, {transform_indices = @transform_10, window_bounds = array<i64: 8, 128>}]} {
    %c0 = arith.constant 0 : index
    %c0_0 = arith.constant 0 : index
    %0 = vector.load %arg1[%c0, %c0_0] : memref<128x128xf32, #tpu.memory_space<vmem>>, vector<128x128xf32>
    %c0_1 = arith.constant 0 : index
    %c0_2 = arith.constant 0 : index
    %1 = vector.load %arg4[%c0_1, %c0_2] : memref<128x128xf32, #tpu.memory_space<vmem>>, vector<128x128xf32>
    %c0_3 = arith.constant 0 : index
    %c0_4 = arith.constant 0 : index
    %2 = vector.load %arg5[%c0_3, %c0_4] : memref<1x128xf32, #tpu.memory_space<vmem>>, vector<1x128xf32>
    %cst = arith.constant dense<0.000000e+00> : vector<128x128xf32>
    %3 = tpu.matmul %0, %1, %cst {dimension_numbers = #tpu.dot_dimension_numbers<[1], [0], [0], [1], [0, 0, 1, 1], [], []>} : vector<128x128xf32>, vector<128x128xf32>, vector<128x128xf32> -> vector<128x128xf32>
    %4 = vector.broadcast %2 : vector<1x128xf32> to vector<128x128xf32>
    %5 = arith.addf %3, %4 : vector<128x128xf32>
    %cst_5 = arith.constant 0.000000e+00 : f32
    %6 = vector.broadcast %cst_5 : f32 to vector<128x128xf32>
    %7 = arith.maximumf %5, %6 : vector<128x128xf32>
    %c0_6 = arith.constant 0 : index
    %c0_7 = arith.constant 0 : index
    %8 = vector.load %arg6[%c0_6, %c0_7] : memref<128x128xf32, #tpu.memory_space<vmem>>, vector<128x128xf32>
    %c0_8 = arith.constant 0 : index
    %c0_9 = arith.constant 0 : index
    %9 = vector.load %arg7[%c0_8, %c0_9] : memref<1x128xf32, #tpu.memory_space<vmem>>, vector<1x128xf32>
    %cst_10 = arith.constant dense<0.000000e+00> : vector<128x128xf32>
    %10 = tpu.matmul %7, %8, %cst_10 {dimension_numbers = #tpu.dot_dimension_numbers<[1], [0], [0], [1], [0, 0, 1, 1], [], []>} : vector<128x128xf32>, vector<128x128xf32>, vector<128x128xf32> -> vector<128x128xf32>
    %11 = vector.broadcast %9 : vector<1x128xf32> to vector<128x128xf32>
    %12 = arith.addf %10, %11 : vector<128x128xf32>
    %cst_11 = arith.constant 0.000000e+00 : f32
    %13 = vector.broadcast %cst_11 : f32 to vector<128x128xf32>
    %14 = arith.maximumf %12, %13 : vector<128x128xf32>
    %c0_12 = arith.constant 0 : index
    %c0_13 = arith.constant 0 : index
    %15 = vector.load %arg8[%c0_12, %c0_13] : memref<128x128xf32, #tpu.memory_space<vmem>>, vector<128x128xf32>
    %c0_14 = arith.constant 0 : index
    %c0_15 = arith.constant 0 : index
    %16 = vector.load %arg9[%c0_14, %c0_15] : memref<1x128xf32, #tpu.memory_space<vmem>>, vector<1x128xf32>
    %cst_16 = arith.constant dense<0.000000e+00> : vector<128x128xf32>
    %17 = tpu.matmul %14, %15, %cst_16 {dimension_numbers = #tpu.dot_dimension_numbers<[1], [0], [0], [1], [0, 0, 1, 1], [], []>} : vector<128x128xf32>, vector<128x128xf32>, vector<128x128xf32> -> vector<128x128xf32>
    %18 = vector.broadcast %16 : vector<1x128xf32> to vector<128x128xf32>
    %19 = arith.addf %17, %18 : vector<128x128xf32>
    %c0_17 = arith.constant 0 : index
    %c0_18 = arith.constant 0 : index
    %20 = vector.load %arg10[%c0_17, %c0_18] : memref<128x128xf32, #tpu.memory_space<vmem>>, vector<128x128xf32>
    tpu.vector_store %arg10[%c0_17, %c0_18], %19 {strides = array<i32>} : memref<128x128xf32, #tpu.memory_space<vmem>>, vector<128x128xf32>,
    %c0_19 = arith.constant 0 : index
    %c0_20 = arith.constant 0 : index
    %21 = vector.load %arg2[%c0_19, %c0_20] : memref<128x128xf32, #tpu.memory_space<vmem>>, vector<128x128xf32>
    %cst_21 = arith.constant 0.000000e+00 : f32
    %22 = vector.broadcast %cst_21 : f32 to vector<128x128xf32>
    %23 = arith.maximumf %19, %22 : vector<128x128xf32>
    %24 = arith.mulf %19, %21 : vector<128x128xf32>
    %25 = arith.subf %23, %24 : vector<128x128xf32>
    %26 = math.absf %19 : vector<128x128xf32>
    %cst_22 = arith.constant 0.000000e+00 : f32
    %27 = vector.broadcast %cst_22 : f32 to vector<128x128xf32>
    %28 = arith.subf %27, %26 : vector<128x128xf32>
    %29 = math.exp %28 : vector<128x128xf32>
    %cst_23 = arith.constant 1.000000e+00 : f32
    %30 = vector.broadcast %cst_23 : f32 to vector<128x128xf32>
    %31 = arith.addf %30, %29 : vector<128x128xf32>
    %32 = math.log %31 : vector<128x128xf32>
    %33 = arith.addf %25, %32 : vector<128x128xf32>
    %c0_24 = arith.constant 0 : index
    %c0_25 = arith.constant 0 : index
    %34 = vector.load %arg3[%c0_24, %c0_25] : memref<128x128xf32, #tpu.memory_space<vmem>>, vector<128x128xf32>
    %35 = arith.mulf %33, %34 : vector<128x128xf32>
    %cst_26 = arith.constant dense<0.000000e+00> : vector<128xf32>
    %36 = vector.multi_reduction <add>, %35, %cst_26 [0] : vector<128x128xf32> to vector<128xf32>
    %37 = vector.shape_cast %36 : vector<128xf32> to vector<1x128xf32>
    %38 = vector.shape_cast %37 : vector<1x128xf32> to vector<1x128xf32>
    %39 = vector.broadcast %38 : vector<1x128xf32> to vector<8x128xf32>
    %c0_27 = arith.constant 0 : index
    %c0_28 = arith.constant 0 : index
    %40 = vector.load %arg11[%c0_27, %c0_28] : memref<8x128xf32, #tpu.memory_space<vmem>>, vector<8x128xf32>
    tpu.vector_store %arg11[%c0_27, %c0_28], %39 {strides = array<i32>} : memref<8x128xf32, #tpu.memory_space<vmem>>, vector<8x128xf32>,
    return
  }
  func.func @transform_0(%arg0: i32) -> (i32, i32) {
    %c0_i32 = arith.constant 0 : i32
    %c0_i32_0 = arith.constant 0 : i32
    return %arg0, %c0_i32 : i32, i32
  }
  func.func @transform_1(%arg0: i32) -> (i32, i32) {
    %c0_i32 = arith.constant 0 : i32
    %c0_i32_0 = arith.constant 0 : i32
    return %arg0, %c0_i32 : i32, i32
  }
  func.func @transform_2(%arg0: i32) -> (i32, i32) {
    %c0_i32 = arith.constant 0 : i32
    %c0_i32_0 = arith.constant 0 : i32
    return %arg0, %c0_i32 : i32, i32
  }
  func.func @transform_3(%arg0: i32) -> (i32, i32) {
    %c0_i32 = arith.constant 0 : i32
    %c0_i32_0 = arith.constant 0 : i32
    %c0_i32_1 = arith.constant 0 : i32
    return %c0_i32, %c0_i32_0 : i32, i32
  }
  func.func @transform_4(%arg0: i32) -> (i32, i32) {
    %c0_i32 = arith.constant 0 : i32
    %c0_i32_0 = arith.constant 0 : i32
    %c0_i32_1 = arith.constant 0 : i32
    return %c0_i32, %c0_i32_0 : i32, i32
  }
  func.func @transform_5(%arg0: i32) -> (i32, i32) {
    %c0_i32 = arith.constant 0 : i32
    %c0_i32_0 = arith.constant 0 : i32
    %c0_i32_1 = arith.constant 0 : i32
    return %c0_i32, %c0_i32_0 : i32, i32
  }
  func.func @transform_6(%arg0: i32) -> (i32, i32) {
    %c0_i32 = arith.constant 0 : i32
    %c0_i32_0 = arith.constant 0 : i32
    %c0_i32_1 = arith.constant 0 : i32
    return %c0_i32, %c0_i32_0 : i32, i32
  }
  func.func @transform_7(%arg0: i32) -> (i32, i32) {
    %c0_i32 = arith.constant 0 : i32
    %c0_i32_0 = arith.constant 0 : i32
    %c0_i32_1 = arith.constant 0 : i32
    return %c0_i32, %c0_i32_0 : i32, i32
  }
  func.func @transform_8(%arg0: i32) -> (i32, i32) {
    %c0_i32 = arith.constant 0 : i32
    %c0_i32_0 = arith.constant 0 : i32
    %c0_i32_1 = arith.constant 0 : i32
    return %c0_i32, %c0_i32_0 : i32, i32
  }
  func.func @transform_9(%arg0: i32) -> (i32, i32) {
    %c0_i32 = arith.constant 0 : i32
    %c0_i32_0 = arith.constant 0 : i32
    return %arg0, %c0_i32 : i32, i32
  }
  func.func @transform_10(%arg0: i32) -> (i32, i32) {
    %c0_i32 = arith.constant 0 : i32
    %c0_i32_0 = arith.constant 0 : i32
    return %arg0, %c0_i32 : i32, i32
  }
}

</mosaic_0001>

<llo_original>
// kernel: tpu_custom_call.1
$region0: #{tpu_custom_call.1}
  #allocation0 [shape = 'u32[]', space=smem, size = 0x4, offset = 0x4, fixed_abs, tag = 'smem constant byte address 0x4 - core index']
  #allocation1 [shape = 'u32[144,128]{1,0:T(1,128)}', space=vmem, size = 0x12000, scoped, tag = 'internal scratch']
  %s0 = inlined_call_operand.hbm [shape: f32[256,128], index: 0, kind: input, shape index: {}]
  %s1 = inlined_call_operand.hbm [shape: f32[256,128], index: 1, kind: input, shape index: {}]
  %s2 = inlined_call_operand.hbm [shape: f32[256,128], index: 2, kind: input, shape index: {}]
  %s3 = inlined_call_operand.hbm [shape: f32[128,128], index: 3, kind: input, shape index: {}]
  %s4 = inlined_call_operand.vmem [shape: f32[1,128], index: 4, kind: input, shape index: {}]
  %s5 = inlined_call_operand.hbm [shape: f32[128,128], index: 5, kind: input, shape index: {}]
  %s6 = inlined_call_operand.vmem [shape: f32[1,128], index: 6, kind: input, shape index: {}]
  %s7 = inlined_call_operand.hbm [shape: f32[128,128], index: 7, kind: input, shape index: {}]
  %s8 = inlined_call_operand.vmem [shape: f32[1,128], index: 8, kind: input, shape index: {}]
  %s9 = inlined_call_operand.hbm [shape: f32[256,128], index: 9, kind: output, shape index: {0}]
  %s10 = inlined_call_operand.hbm [shape: f32[16,128], index: 10, kind: output, shape index: {1}]
  %11 = xla_tuple %s9, %s10
  %s12 = sld [smem:[#allocation0]]
  $region101: #{tpu_custom_call.1} parent=0
    _
  %s14 = ssub.s32 1, %s12
  %s15 = scalar_select 0, %s14, %s12
  $region1: #{tpu_custom_call.1} parent=0
    #allocation2 [shape = 'u8[131072]{0}', space=vmem, size = 0x20000, scoped, tag = 'input window, operand 0']
    #allocation3 [shape = 's32[2]{0}', space=sflag, size = 0x8, scoped, tag = 'scoped memory for tpu_custom_call.1']
    #allocation4 [shape = 's32[2]{0}', space=sflag, size = 0x8, scoped, tag = 'scoped memory for tpu_custom_call.1']
    #allocation5 [shape = 'u8[131072]{0}', space=vmem, size = 0x20000, scoped, tag = 'input window, operand 1']
    #allocation6 [shape = 's32[2]{0}', space=sflag, size = 0x8, scoped, tag = 'scoped memory for tpu_custom_call.1']
    #allocation7 [shape = 'u8[131072]{0}', space=vmem, size = 0x20000, scoped, tag = 'input window, operand 2']
    #allocation8 [shape = 'u8[65536]{0}', space=vmem, size = 0x10000, scoped, tag = 'input window, operand 3, single buffered']
    #allocation9 [shape = 's32[1]{0}', space=sflag, size = 0x4, scoped, tag = 'scoped memory for tpu_custom_call.1']
    #allocation10 [shape = 'u8[65536]{0}', space=vmem, size = 0x10000, scoped, tag = 'input window, operand 5, single buffered']
    #allocation11 [shape = 'u8[65536]{0}', space=vmem, size = 0x10000, scoped, tag = 'input window, operand 7, single buffered']
    #allocation12 [shape = 's32[1]{0}', space=sflag, size = 0x4, scoped, tag = 'scoped memory for tpu_custom_call.1']
    #allocation13 [shape = 'u8[131072]{0}', space=vmem, size = 0x20000, scoped, tag = 'output window, operand 0']
    #allocation14 [shape = 'u8[8192]{0}', space=vmem, size = 0x2000, scoped, tag = 'output window, operand 1']
    #allocation15 [shape = 's32[2]{0}', space=sflag, size = 0x8, scoped, tag = 'scoped memory for tpu_custom_call.1']
    %16 = vsyncpa [#allocation3], 0
    %s17 = scalar_lea.sflag [#allocation3], 1
    %18 = vsyncpa %s17, 0
    %19 = vsyncpa [#allocation6], 0
    %s20 = scalar_lea.sflag [#allocation6], 1
    %21 = vsyncpa %s20, 0
    %22 = vsyncpa [#allocation9], 0
    %23 = vsyncpa [#allocation12], 0
    %24 = vsyncpa [#allocation4], 0
    %s25 = scalar_lea.sflag [#allocation4], 1
    %26 = vsyncpa %s25, 0
    %27 = vsyncpa [#allocation15], 0
    %s28 = scalar_lea.sflag [#allocation15], 1
    %29 = vsyncpa %s28, 0
    loop: start=0, step=1, limit=4
    $region2: #{tpu_custom_call.1} parent=1 // loop_pre_header
      _
    $region3: #{tpu_custom_call.1} parent=1 // loop_header
      %s31 = sphi 0, %s35
      %p32 = scmp.ge.s32.totalorder %s31, 4
      %s41 = sphi 0, %s43
      %s44 = sphi 0, %s41
      %s45 = sphi 0, %s44
      %s61 = sphi 0, %s45
      %s67 = sphi 0, %s69
      %s70 = sphi 0, %s67
      %s71 = sphi 0, %s70
      %s87 = sphi 0, %s71
      %s93 = sphi 0, %s95
      %s96 = sphi 0, %s93
      %s97 = sphi 0, %s96
      %s113 = sphi 0, %s97
      %s117 = sphi 0, %s117
      %s119 = sphi 0, %s117
      %s120 = sphi 0, %s119
      %s134 = sphi 0, %s120
      %s138 = sphi 0, %s138
      %s140 = sphi 0, %s138
      %s141 = sphi 0, %s140
      %s155 = sphi 0, %s141
      %s159 = sphi 0, %s159
      %s161 = sphi 0, %s159
      %s162 = sphi 0, %s161
      %s176 = sphi 0, %s162
      %s180 = sphi 0, %s180
      %s182 = sphi 0, %s180
      %s183 = sphi 0, %s182
      %s197 = sphi 0, %s183
      %s201 = sphi 0, %s201
      %s203 = sphi 0, %s201
      %s204 = sphi 0, %s203
      %s218 = sphi 0, %s204
      %s222 = sphi 0, %s222
      %s224 = sphi 0, %s222
      %s225 = sphi 0, %s224
      %s239 = sphi 0, %s225
      %s245 = sphi 0, %s247
      %s248 = sphi 0, %s245
      %s249 = sphi 0, %s248
      %s265 = sphi 0, %s249
      %s271 = sphi 0, %s273
      %s274 = sphi 0, %s271
      %s275 = sphi 0, %s274
      %s291 = sphi 0, %s275
    $region4: #{tpu_custom_call.1} parent=1 // loop_header_branch
      %34 = sbr.rel (%p32) target = $region8
    $region5: #{tpu_custom_call.1} parent=1 // loop_body
      %s36 = ssub.s32 %s31, 1
      %s37 = ssub.s32 %s31, 2
      %s38 = sadd.s32 %s31, 1
      %s39 = ssub.s32 %s31, %s38
      %p40 = scmp.eq.s32.totalorder %s39, 0
      %s42 = sadd.s32 %s41, 1
      %s43 = scalar_select %p40, %s41, %s42
      %p46 = pneg %p40
      %p47 = scmp.eq.s32.totalorder %s31, 1
      %p48 = por %p46, %p47
      %p49 = scmp.ne.s32.totalorder %s41, %s44
      %p50 = scmp.eq.s32.totalorder %s31, 0
      %p51 = por %p49, %p50
      %p52 = scmp.ne.s32.totalorder %s41, %s44
      %p53 = scmp.eq.s32.totalorder %s36, 1
      %p54 = por %p52, %p53
      %p55 = scmp.ne.s32.totalorder %s44, %s45
      %p56 = scmp.eq.s32.totalorder %s36, 0
      %p57 = por %p55, %p56
      %p58 = scmp.ne.s32.totalorder %s44, %s45
      %p59 = scmp.eq.s32.totalorder %s37, 1
      %p60 = por %p58, %p59
      %p62 = scmp.ne.s32.totalorder %s45, %s61
      %p63 = scmp.eq.s32.totalorder %s37, 0
      %p64 = por %p62, %p63
      %s65 = ssub.s32 %s31, %s38
      %p66 = scmp.eq.s32.totalorder %s65, 0
      %s68 = sadd.s32 %s67, 1
      %s69 = scalar_select %p66, %s67, %s68
      %p72 = pneg %p66
      %p73 = scmp.eq.s32.totalorder %s31, 1
      %p74 = por %p72, %p73
      %p75 = scmp.ne.s32.totalorder %s67, %s70
      %p76 = scmp.eq.s32.totalorder %s31, 0
      %p77 = por %p75, %p76
      %p78 = scmp.ne.s32.totalorder %s67, %s70
      %p79 = scmp.eq.s32.totalorder %s36, 1
      %p80 = por %p78, %p79
      %p81 = scmp.ne.s32.totalorder %s70, %s71
      %p82 = scmp.eq.s32.totalorder %s36, 0
      %p83 = por %p81, %p82
      %p84 = scmp.ne.s32.totalorder %s70, %s71
      %p85 = scmp.eq.s32.totalorder %s37, 1
      %p86 = por %p84, %p85
      %p88 = scmp.ne.s32.totalorder %s71, %s87
      %p89 = scmp.eq.s32.totalorder %s37, 0
      %p90 = por %p88, %p89
      %s91 = ssub.s32 %s31, %s38
      %p92 = scmp.eq.s32.totalorder %s91, 0
      %s94 = sadd.s32 %s93, 1
      %s95 = scalar_select %p92, %s93, %s94
      %p98 = pneg %p92
      %p99 = scmp.eq.s32.totalorder %s31, 1
      %p100 = por %p98, %p99
      %p101 = scmp.ne.s32.totalorder %s93, %s96
      %p102 = scmp.eq.s32.totalorder %s31, 0
      %p103 = por %p101, %p102
      %p104 = scmp.ne.s32.totalorder %s93, %s96
      %p105 = scmp.eq.s32.totalorder %s36, 1
      %p106 = por %p104, %p105
      %p107 = scmp.ne.s32.totalorder %s96, %s97
      %p108 = scmp.eq.s32.totalorder %s36, 0
      %p109 = por %p107, %p108
      %p110 = scmp.ne.s32.totalorder %s96, %s97
      %p111 = scmp.eq.s32.totalorder %s37, 1
      %p112 = por %p110, %p111
      %p114 = scmp.ne.s32.totalorder %s97, %s113
      %p115 = scmp.eq.s32.totalorder %s37, 0
      %p116 = por %p114, %p115
      %s118 = sadd.s32 %s117, 1
      %p121 = scmp.eq.s32.totalorder %s31, 1
      %p122 = scmp.ne.s32.totalorder %s117, %s119
      %p123 = scmp.eq.s32.totalorder %s31, 0
      %p124 = por %p122, %p123
      %p125 = scmp.ne.s32.totalorder %s117, %s119
      %p126 = scmp.eq.s32.totalorder %s36, 1
      %p127 = por %p125, %p126
      %p128 = scmp.ne.s32.totalorder %s119, %s120
      %p129 = scmp.eq.s32.totalorder %s36, 0
      %p130 = por %p128, %p129
      %p131 = scmp.ne.s32.totalorder %s119, %s120
      %p132 = scmp.eq.s32.totalorder %s37, 1
      %p133 = por %p131, %p132
      %p135 = scmp.ne.s32.totalorder %s120, %s134
      %p136 = scmp.eq.s32.totalorder %s37, 0
      %p137 = por %p135, %p136
      %s139 = sadd.s32 %s138, 1
      %p142 = scmp.eq.s32.totalorder %s31, 1
      %p143 = scmp.ne.s32.totalorder %s138, %s140
      %p144 = scmp.eq.s32.totalorder %s31, 0
      %p145 = por %p143, %p144
      %p146 = scmp.ne.s32.totalorder %s138, %s140
      %p147 = scmp.eq.s32.totalorder %s36, 1
      %p148 = por %p146, %p147
      %p149 = scmp.ne.s32.totalorder %s140, %s141
      %p150 = scmp.eq.s32.totalorder %s36, 0
      %p151 = por %p149, %p150
      %p152 = scmp.ne.s32.totalorder %s140, %s141
      %p153 = scmp.eq.s32.totalorder %s37, 1
      %p154 = por %p152, %p153
      %p156 = scmp.ne.s32.totalorder %s141, %s155
      %p157 = scmp.eq.s32.totalorder %s37, 0
      %p158 = por %p156, %p157
      %s160 = sadd.s32 %s159, 1
      %p163 = scmp.eq.s32.totalorder %s31, 1
      %p164 = scmp.ne.s32.totalorder %s159, %s161
      %p165 = scmp.eq.s32.totalorder %s31, 0
      %p166 = por %p164, %p165
      %p167 = scmp.ne.s32.totalorder %s159, %s161
      %p168 = scmp.eq.s32.totalorder %s36, 1
      %p169 = por %p167, %p168
      %p170 = scmp.ne.s32.totalorder %s161, %s162
      %p171 = scmp.eq.s32.totalorder %s36, 0
      %p172 = por %p170, %p171
      %p173 = scmp.ne.s32.totalorder %s161, %s162
      %p174 = scmp.eq.s32.totalorder %s37, 1
      %p175 = por %p173, %p174
      %p177 = scmp.ne.s32.totalorder %s162, %s176
      %p178 = scmp.eq.s32.totalorder %s37, 0
      %p179 = por %p177, %p178
      %s181 = sadd.s32 %s180, 1
      %p184 = scmp.eq.s32.totalorder %s31, 1
      %p185 = scmp.ne.s32.totalorder %s180, %s182
      %p186 = scmp.eq.s32.totalorder %s31, 0
      %p187 = por %p185, %p186
      %p188 = scmp.ne.s32.totalorder %s180, %s182
      %p189 = scmp.eq.s32.totalorder %s36, 1
      %p190 = por %p188, %p189
      %p191 = scmp.ne.s32.totalorder %s182, %s183
      %p192 = scmp.eq.s32.totalorder %s36, 0
      %p193 = por %p191, %p192
      %p194 = scmp.ne.s32.totalorder %s182, %s183
      %p195 = scmp.eq.s32.totalorder %s37, 1
      %p196 = por %p194, %p195
      %p198 = scmp.ne.s32.totalorder %s183, %s197
      %p199 = scmp.eq.s32.totalorder %s37, 0
      %p200 = por %p198, %p199
      %s202 = sadd.s32 %s201, 1
      %p205 = scmp.eq.s32.totalorder %s31, 1
      %p206 = scmp.ne.s32.totalorder %s201, %s203
      %p207 = scmp.eq.s32.totalorder %s31, 0
      %p208 = por %p206, %p207
      %p209 = scmp.ne.s32.totalorder %s201, %s203
      %p210 = scmp.eq.s32.totalorder %s36, 1
      %p211 = por %p209, %p210
      %p212 = scmp.ne.s32.totalorder %s203, %s204
      %p213 = scmp.eq.s32.totalorder %s36, 0
      %p214 = por %p212, %p213
      %p215 = scmp.ne.s32.totalorder %s203, %s204
      %p216 = scmp.eq.s32.totalorder %s37, 1
      %p217 = por %p215, %p216
      %p219 = scmp.ne.s32.totalorder %s204, %s218
      %p220 = scmp.eq.s32.totalorder %s37, 0
      %p221 = por %p219, %p220
      %s223 = sadd.s32 %s222, 1
      %p226 = scmp.eq.s32.totalorder %s31, 1
      %p227 = scmp.ne.s32.totalorder %s222, %s224
      %p228 = scmp.eq.s32.totalorder %s31, 0
      %p229 = por %p227, %p228
      %p230 = scmp.ne.s32.totalorder %s222, %s224
      %p231 = scmp.eq.s32.totalorder %s36, 1
      %p232 = por %p230, %p231
      %p233 = scmp.ne.s32.totalorder %s224, %s225
      %p234 = scmp.eq.s32.totalorder %s36, 0
      %p235 = por %p233, %p234
      %p236 = scmp.ne.s32.totalorder %s224, %s225
      %p237 = scmp.eq.s32.totalorder %s37, 1
      %p238 = por %p236, %p237
      %p240 = scmp.ne.s32.totalorder %s225, %s239
      %p241 = scmp.eq.s32.totalorder %s37, 0
      %p242 = por %p240, %p241
      %s243 = ssub.s32 %s31, %s38
      %p244 = scmp.eq.s32.totalorder %s243, 0
      %s246 = sadd.s32 %s245, 1
      %s247 = scalar_select %p244, %s245, %s246
      %p250 = pneg %p244
      %p251 = scmp.eq.s32.totalorder %s31, 1
      %p252 = por %p250, %p251
      %p253 = scmp.ne.s32.totalorder %s245, %s248
      %p254 = scmp.eq.s32.totalorder %s31, 0
      %p255 = por %p253, %p254
      %p256 = scmp.ne.s32.totalorder %s245, %s248
      %p257 = scmp.eq.s32.totalorder %s36, 1
      %p258 = por %p256, %p257
      %p259 = scmp.ne.s32.totalorder %s248, %s249
      %p260 = scmp.eq.s32.totalorder %s36, 0
      %p261 = por %p259, %p260
      %p262 = scmp.ne.s32.totalorder %s248, %s249
      %p263 = scmp.eq.s32.totalorder %s37, 1
      %p264 = por %p262, %p263
      %p266 = scmp.ne.s32.totalorder %s249, %s265
      %p267 = scmp.eq.s32.totalorder %s37, 0
      %p268 = por %p266, %p267
      %s269 = ssub.s32 %s31, %s38
      %p270 = scmp.eq.s32.totalorder %s269, 0
      %s272 = sadd.s32 %s271, 1
      %s273 = scalar_select %p270, %s271, %s272
      %p276 = pneg %p270
      %p277 = scmp.eq.s32.totalorder %s31, 1
      %p278 = por %p276, %p277
      %p279 = scmp.ne.s32.totalorder %s271, %s274
      %p280 = scmp.eq.s32.totalorder %s31, 0
      %p281 = por %p279, %p280
      %p282 = scmp.ne.s32.totalorder %s271, %s274
      %p283 = scmp.eq.s32.totalorder %s36, 1
      %p284 = por %p282, %p283
      %p285 = scmp.ne.s32.totalorder %s274, %s275
      %p286 = scmp.eq.s32.totalorder %s36, 0
      %p287 = por %p285, %p286
      %p288 = scmp.ne.s32.totalorder %s274, %s275
      %p289 = scmp.eq.s32.totalorder %s37, 1
      %p290 = por %p288, %p289
      %p292 = scmp.ne.s32.totalorder %s275, %s291
      %p293 = scmp.eq.s32.totalorder %s37, 0
      %p294 = por %p292, %p293
      %p295 = scmp.le.s32.totalorder 1, %s31
      %p296 = scmp.lt.s32.totalorder %s31, 3
      %p297 = pnand %p295, %p296
      %p298 = pneg %p297
      // Predicated region
      $region9: #{tpu_custom_call.1} parent=5 // pred_check
        _
      $region10: #{tpu_custom_call.1} parent=5 // pred_check_branch
        %300 = sbr.rel (%p297) target = $region12
      $region11: #{tpu_custom_call.1} parent=5 // pred_region
        %s301 = ssub.s32 %s31, 1
        // Predicated region
        $region13: #{tpu_custom_call.1} parent=11 // pred_check
          %p302 = pneg %p130
        $region14: #{tpu_custom_call.1} parent=11 // pred_check_branch
          %304 = sbr.rel (%p302) target = $region16
        $region15: #{tpu_custom_call.1} parent=11 // pred_region
          %s306 = ssub.s32 2048, 2048
          %307 = vsyncadd [#allocation9], %s306
          %s308 = sshll.u32 [#allocation8], 4
          %s309 = int_to_ptr.vmem [resolvable:$true] %s308
          %314 = dma.hbm_to_vmem [thread:$0]  %s3, 2048, %s309, [#allocation9], 128, 128, 8
        $region16: #{tpu_custom_call.1} parent=11 // pred_fallthru
          _
        // Predicated region
        $region17: #{tpu_custom_call.1} parent=11 // pred_check
          %p315 = pneg %p151
        $region18: #{tpu_custom_call.1} parent=11 // pred_check_branch
          %317 = sbr.rel (%p315) target = $region20
        $region19: #{tpu_custom_call.1} parent=11 // pred_region
          _
        $region20: #{tpu_custom_call.1} parent=11 // pred_fallthru
          _
        // Predicated region
        $region21: #{tpu_custom_call.1} parent=11 // pred_check
          %p318 = pneg %p172
        $region22: #{tpu_custom_call.1} parent=11 // pred_check_branch
          %320 = sbr.rel (%p318) target = $region24
        $region23: #{tpu_custom_call.1} parent=11 // pred_region
          %s322 = ssub.s32 2048, 2048
          %323 = vsyncadd [#allocation9], %s322
          %s324 = sshll.u32 [#allocation10], 4
          %s325 = int_to_ptr.vmem [resolvable:$true] %s324
          %330 = dma.hbm_to_vmem [thread:$0]  %s5, 2048, %s325, [#allocation9], 128, 128, 8
        $region24: #{tpu_custom_call.1} parent=11 // pred_fallthru
          _
        // Predicated region
        $region25: #{tpu_custom_call.1} parent=11 // pred_check
          %p331 = pneg %p193
        $region26: #{tpu_custom_call.1} parent=11 // pred_check_branch
          %333 = sbr.rel (%p331) target = $region28
        $region27: #{tpu_custom_call.1} parent=11 // pred_region
          _
        $region28: #{tpu_custom_call.1} parent=11 // pred_fallthru
          _
        // Predicated region
        $region29: #{tpu_custom_call.1} parent=11 // pred_check
          %p334 = pneg %p214
        $region30: #{tpu_custom_call.1} parent=11 // pred_check_branch
          %336 = sbr.rel (%p334) target = $region32
        $region31: #{tpu_custom_call.1} parent=11 // pred_region
          %s338 = ssub.s32 2048, 2048
          %339 = vsyncadd [#allocation12], %s338
          %s340 = sshll.u32 [#allocation11], 4
          %s341 = int_to_ptr.vmem [resolvable:$true] %s340
          %346 = dma.hbm_to_vmem [thread:$0]  %s7, 2048, %s341, [#allocation12], 128, 128, 8
        $region32: #{tpu_custom_call.1} parent=11 // pred_fallthru
          _
        // Predicated region
        $region33: #{tpu_custom_call.1} parent=11 // pred_check
          %p347 = pneg %p235
        $region34: #{tpu_custom_call.1} parent=11 // pred_check_branch
          %349 = sbr.rel (%p347) target = $region36
        $region35: #{tpu_custom_call.1} parent=11 // pred_region
          _
        $region36: #{tpu_custom_call.1} parent=11 // pred_fallthru
          _
      $region12: #{tpu_custom_call.1} parent=5 // pred_fallthru
        _
      %p350 = scmp.lt.s32.totalorder %s31, 2
      // Predicated region
      $region37: #{tpu_custom_call.1} parent=5 // pred_check
        %p351 = pneg %p350
      $region38: #{tpu_custom_call.1} parent=5 // pred_check_branch
        %353 = sbr.rel (%p351) target = $region40
      $region39: #{tpu_custom_call.1} parent=5 // pred_region
        // Predicated region
        $region41: #{tpu_custom_call.1} parent=39 // pred_check
          %p354 = pneg %p51
        $region42: #{tpu_custom_call.1} parent=39 // pred_check_branch
          %356 = sbr.rel (%p354) target = $region44
        $region43: #{tpu_custom_call.1} parent=39 // pred_region
          %s357 = sand.u32 %s41, 1
          %s358 = scalar_lea.sflag [#allocation3], %s357
          %s359 = sand.u32 %s41, 1
          %s360 = smul.addr %s359, 128
          %s361 = scalar_lea.vmem [#allocation2], %s360
          %s362 = smul.u32 16, %s31
          %s364 = ssub.s32 2048, 2048
          %365 = vsyncadd %s358, %s364
          %s366 = smul.addr %s362, 128
          %s367 = scalar_lea.hbm %s0, %s366
          %s368 = sshll.u32 %s361, 4
          %s369 = int_to_ptr.vmem [resolvable:$true] %s368
          %374 = dma.hbm_to_vmem [thread:$0]  %s367, 2048, %s369, %s358, 128, 128, 8
        $region44: #{tpu_custom_call.1} parent=39 // pred_fallthru
          _
        // Predicated region
        $region45: #{tpu_custom_call.1} parent=39 // pred_check
          %p375 = pneg %p77
        $region46: #{tpu_custom_call.1} parent=39 // pred_check_branch
          %377 = sbr.rel (%p375) target = $region48
        $region47: #{tpu_custom_call.1} parent=39 // pred_region
          %s378 = sand.u32 %s31, 1
          %s379 = scalar_lea.sflag [#allocation6], %s378
          %s380 = sand.u32 %s67, 1
          %s381 = smul.addr %s380, 128
          %s382 = scalar_lea.vmem [#allocation5], %s381
          %s383 = smul.u32 16, %s31
          %s385 = ssub.s32 2048, 2048
          %386 = vsyncadd %s379, %s385
          %s387 = smul.addr %s383, 128
          %s388 = scalar_lea.hbm %s1, %s387
          %s389 = sshll.u32 %s382, 4
          %s390 = int_to_ptr.vmem [resolvable:$true] %s389
          %395 = dma.hbm_to_vmem [thread:$0]  %s388, 2048, %s390, %s379, 128, 128, 8
        $region48: #{tpu_custom_call.1} parent=39 // pred_fallthru
          _
        // Predicated region
        $region49: #{tpu_custom_call.1} parent=39 // pred_check
          %p396 = pneg %p103
        $region50: #{tpu_custom_call.1} parent=39 // pred_check_branch
          %398 = sbr.rel (%p396) target = $region52
        $region51: #{tpu_custom_call.1} parent=39 // pred_region
          %s399 = sand.u32 %s31, 1
          %s400 = scalar_lea.sflag [#allocation6], %s399
          %s401 = sand.u32 %s93, 1
          %s402 = smul.addr %s401, 128
          %s403 = scalar_lea.vmem [#allocation7], %s402
          %s404 = smul.u32 16, %s31
          %s406 = ssub.s32 2048, 2048
          %407 = vsyncadd %s400, %s406
          %s408 = smul.addr %s404, 128
          %s409 = scalar_lea.hbm %s2, %s408
          %s410 = sshll.u32 %s403, 4
          %s411 = int_to_ptr.vmem [resolvable:$true] %s410
          %416 = dma.hbm_to_vmem [thread:$0]  %s409, 2048, %s411, %s400, 128, 128, 8
        $region52: #{tpu_custom_call.1} parent=39 // pred_fallthru
          _
      $region40: #{tpu_custom_call.1} parent=5 // pred_fallthru
        _
      %p417 = scmp.le.s32.totalorder 1, %s31
      %p418 = scmp.lt.s32.totalorder %s31, 3
      %p419 = pnand %p417, %p418
      %p420 = pneg %p419
      // Predicated region
      $region53: #{tpu_custom_call.1} parent=5 // pred_check
        _
      $region54: #{tpu_custom_call.1} parent=5 // pred_check_branch
        %422 = sbr.rel (%p419) target = $region56
      $region55: #{tpu_custom_call.1} parent=5 // pred_region
        %s423 = ssub.s32 %s31, 1
        %s424 = sand.u32 %s44, 1
        %s425 = scalar_lea.sflag [#allocation3], %s424
        %s426 = sand.u32 %s44, 1
        %s427 = smul.addr %s426, 128
        %s428 = scalar_lea.vmem [#allocation2], %s427
        // Predicated region
        $region57: #{tpu_custom_call.1} parent=55 // pred_check
          %p429 = pneg %p57
        $region58: #{tpu_custom_call.1} parent=55 // pred_check_branch
          %431 = sbr.rel (%p429) target = $region60
        $region59: #{tpu_custom_call.1} parent=55 // pred_region
          %432 = dma.done %s425, 2048
        $region60: #{tpu_custom_call.1} parent=55 // pred_fallthru
          _
        %s433 = sand.u32 %s36, 1
        %s434 = scalar_lea.sflag [#allocation6], %s433
        %s435 = sand.u32 %s70, 1
        %s436 = smul.addr %s435, 128
        %s437 = scalar_lea.vmem [#allocation5], %s436
        // Predicated region
        $region61: #{tpu_custom_call.1} parent=55 // pred_check
          %p438 = pneg %p83
        $region62: #{tpu_custom_call.1} parent=55 // pred_check_branch
          %440 = sbr.rel (%p438) target = $region64
        $region63: #{tpu_custom_call.1} parent=55 // pred_region
          %441 = dma.done %s434, 2048
        $region64: #{tpu_custom_call.1} parent=55 // pred_fallthru
          _
        %s442 = sand.u32 %s36, 1
        %s443 = scalar_lea.sflag [#allocation6], %s442
        %s444 = sand.u32 %s96, 1
        %s445 = smul.addr %s444, 128
        %s446 = scalar_lea.vmem [#allocation7], %s445
        // Predicated region
        $region65: #{tpu_custom_call.1} parent=55 // pred_check
          %p447 = pneg %p109
        $region66: #{tpu_custom_call.1} parent=55 // pred_check_branch
          %449 = sbr.rel (%p447) target = $region68
        $region67: #{tpu_custom_call.1} parent=55 // pred_region
          %450 = dma.done %s443, 2048
        $region68: #{tpu_custom_call.1} parent=55 // pred_fallthru
          _
        // Predicated region
        $region69: #{tpu_custom_call.1} parent=55 // pred_check
          %p451 = pneg %p130
        $region70: #{tpu_custom_call.1} parent=55 // pred_check_branch
          %453 = sbr.rel (%p451) target = $region72
        $region71: #{tpu_custom_call.1} parent=55 // pred_region
          %454 = dma.done [#allocation9], 2048
        $region72: #{tpu_custom_call.1} parent=55 // pred_fallthru
          _
        // Predicated region
        $region73: #{tpu_custom_call.1} parent=55 // pred_check
          %p455 = pneg %p172
        $region74: #{tpu_custom_call.1} parent=55 // pred_check_branch
          %457 = sbr.rel (%p455) target = $region76
        $region75: #{tpu_custom_call.1} parent=55 // pred_region
          %458 = dma.done [#allocation9], 2048
        $region76: #{tpu_custom_call.1} parent=55 // pred_fallthru
          _
        // Predicated region
        $region77: #{tpu_custom_call.1} parent=55 // pred_check
          %p459 = pneg %p214
        $region78: #{tpu_custom_call.1} parent=55 // pred_check_branch
          %461 = sbr.rel (%p459) target = $region80
        $region79: #{tpu_custom_call.1} parent=55 // pred_region
          %462 = dma.done [#allocation12], 2048
        $region80: #{tpu_custom_call.1} parent=55 // pred_fallthru
          _
        %s463 = sand.u32 %s44, 1
        %s464 = scalar_lea.sflag [#allocation3], %s463
        %s465 = sand.u32 %s44, 1
        %s466 = smul.addr %s465, 128
        %s467 = scalar_lea.vmem [#allocation2], %s466
        %p468 = pneg %p57
        %p469 = pneg %p54
        %s470 = sand.u32 %s36, 1
        %s471 = scalar_lea.sflag [#allocation6], %s470
        %s472 = sand.u32 %s70, 1
        %s473 = smul.addr %s472, 128
        %s474 = scalar_lea.vmem [#allocation5], %s473
        %p475 = pneg %p83
        %p476 = pneg %p80
        %s477 = sand.u32 %s36, 1
        %s478 = scalar_lea.sflag [#allocation6], %s477
        %s479 = sand.u32 %s96, 1
        %s480 = smul.addr %s479, 128
        %s481 = scalar_lea.vmem [#allocation7], %s480
        %p482 = pneg %p109
        %p483 = pneg %p106
        %p484 = pneg %p130
        %p485 = pneg %p127
        %p486 = pneg %p151
        %p487 = pneg %p148
        %p488 = pneg %p172
        %p489 = pneg %p169
        %p490 = pneg %p193
        %p491 = pneg %p190
        %p492 = pneg %p214
        %p493 = pneg %p211
        %p494 = pneg %p235
        %p495 = pneg %p232
        %p496 = pneg %p261
        %p497 = pneg %p258
        %s498 = sand.u32 %s248, 1
        %s499 = scalar_lea.sflag [#allocation4], %s498
        %s500 = sand.u32 %s248, 1
        %s501 = smul.addr %s500, 128
        %s502 = scalar_lea.vmem [#allocation13], %s501
        %p503 = pneg %p287
        %p504 = pneg %p284
        %s505 = sand.u32 %s274, 1
        %s506 = scalar_lea.sflag [#allocation15], %s505
        %s507 = sand.u32 %s274, 1
        %s508 = smul.addr %s507, 8
        %s509 = scalar_lea.vmem [#allocation14], %s508
        %s510 = smul.u32 16, %s36
        %s511 = smul.u32 16, %s36
        %s512 = smul.u32 16, %s36
        %s513 = smul.u32 16, %s36
        %v514 = vld [vmem:[%s428] sm:$0xff]
        %v515 = vld [vmem:[%s428 + $0x8] sm:$0xff]
        %v516 = vld [vmem:[%s428 + $0x10] sm:$0xff]
        %v517 = vld [vmem:[%s428 + $0x18] sm:$0xff]
        %v518 = vld [vmem:[%s428 + $0x20] sm:$0xff]
        %v519 = vld [vmem:[%s428 + $0x28] sm:$0xff]
        %v520 = vld [vmem:[%s428 + $0x30] sm:$0xff]
        %v521 = vld [vmem:[%s428 + $0x38] sm:$0xff]
        %v522 = vld [vmem:[%s428 + $0x40] sm:$0xff]
        %v523 = vld [vmem:[%s428 + $0x48] sm:$0xff]
        %v524 = vld [vmem:[%s428 + $0x50] sm:$0xff]
        %v525 = vld [vmem:[%s428 + $0x58] sm:$0xff]
        %v526 = vld [vmem:[%s428 + $0x60] sm:$0xff]
        %v527 = vld [vmem:[%s428 + $0x68] sm:$0xff]
        %v528 = vld [vmem:[%s428 + $0x70] sm:$0xff]
        %v529 = vld [vmem:[%s428 + $0x78] sm:$0xff]
        %v530 = vld [vmem:[#allocation8] sm:$0xff]
        %v531 = vld [vmem:[#allocation8 + $0x8] sm:$0xff]
        %v532 = vld [vmem:[#allocation8 + $0x10] sm:$0xff]
        %v533 = vld [vmem:[#allocation8 + $0x18] sm:$0xff]
        %v534 = vld [vmem:[#allocation8 + $0x20] sm:$0xff]
        %v535 = vld [vmem:[#allocation8 + $0x28] sm:$0xff]
        %v536 = vld [vmem:[#allocation8 + $0x30] sm:$0xff]
        %v537 = vld [vmem:[#allocation8 + $0x38] sm:$0xff]
        %v538 = vld [vmem:[#allocation8 + $0x40] sm:$0xff]
        %v539 = vld [vmem:[#allocation8 + $0x48] sm:$0xff]
        %v540 = vld [vmem:[#allocation8 + $0x50] sm:$0xff]
        %v541 = vld [vmem:[#allocation8 + $0x58] sm:$0xff]
        %v542 = vld [vmem:[#allocation8 + $0x60] sm:$0xff]
        %v543 = vld [vmem:[#allocation8 + $0x68] sm:$0xff]
        %v544 = vld [vmem:[#allocation8 + $0x70] sm:$0xff]
        %v545 = vld [vmem:[#allocation8 + $0x78] sm:$0xff]
        %v546 = vld [vmem:[%s4] sm:$0x1]
        %v548 = vlaneseq
        %v549 = vshrl.u32 %v548, 7
        %v550 = vsub.s32 0, %v549
        %v551 = vrot.slane %v546, %v550
        %553 = vmatprep.subr.mxu0 0.0
        %554 = vmatpush1.msra.mxu0 %v530
        %555 = vmatprep.subr.mxu0 0.0
        %556 = vmatpush1.msra.mxu0 %v531
        %557 = vmatprep.subr.mxu0 0.0
        %558 = vmatpush1.msra.mxu0 %v532
        %559 = vmatprep.subr.mxu0 0.0
        %560 = vmatpush1.msra.mxu0 %v533
        %561 = vmatprep.subr.mxu0 0.0
        %562 = vmatpush1.msra.mxu0 %v534
        %563 = vmatprep.subr.mxu0 0.0
        %564 = vmatpush1.msra.mxu0 %v535
        %565 = vmatprep.subr.mxu0 0.0
        %566 = vmatpush1.msra.mxu0 %v536
        %567 = vmatprep.subr.mxu0 0.0
        %568 = vmatpush1.msra.mxu0 %v537
        %569 = vmatprep.subr.mxu0 0.0
        %570 = vmatpush1.msra.mxu0 %v538
        %571 = vmatprep.subr.mxu0 0.0
        %572 = vmatpush1.msra.mxu0 %v539
        %573 = vmatprep.subr.mxu0 0.0
        %574 = vmatpush1.msra.mxu0 %v540
        %575 = vmatprep.subr.mxu0 0.0
        %576 = vmatpush1.msra.mxu0 %v541
        %577 = vmatprep.subr.mxu0 0.0
        %578 = vmatpush1.msra.mxu0 %v542
        %579 = vmatprep.subr.mxu0 0.0
        %580 = vmatpush1.msra.mxu0 %v543
        %581 = vmatprep.subr.mxu0 0.0
        %582 = vmatpush1.msra.mxu0 %v544
        %583 = vmatprep.subr.mxu0 0.0
        %584 = vmatpush1.msra.mxu0 %v545
        %585 = vmatprep.subr.mxu0 0.0
        %586 = vmatpush1.msra.mxu0 0.0
        %587 = vmatprep.subr.mxu0 0.0
        %588 = vmatpush1.msra.mxu0 0.0
        %589 = vmatprep.subr.mxu0 0.0
        %590 = vmatpush1.msra.mxu0 0.0
        %591 = vmatprep.subr.mxu0 0.0
        %592 = vmatpush1.msra.mxu0 0.0
        %593 = vmatprep.subr.mxu0 0.0
        %594 = vmatpush1.msra.mxu0 0.0
        %595 = vmatprep.subr.mxu0 0.0
        %596 = vmatpush1.msra.mxu0 0.0
        %597 = vmatprep.subr.mxu0 0.0
        %598 = vmatpush1.msra.mxu0 0.0
        %599 = vmatprep.subr.mxu0 0.0
        %600 = vmatpush1.msra.mxu0 0.0
        %601 = vmatprep.subr.mxu0 0.0
        %602 = vmatpush1.msra.mxu0 0.0
        %603 = vmatprep.subr.mxu0 0.0
        %604 = vmatpush1.msra.mxu0 0.0
        %605 = vmatprep.subr.mxu0 0.0
        %606 = vmatpush1.msra.mxu0 0.0
        %607 = vmatprep.subr.mxu0 0.0
        %608 = vmatpush1.msra.mxu0 0.0
        %609 = vmatprep.subr.mxu0 0.0
        %610 = vmatpush1.msra.mxu0 0.0
        %611 = vmatprep.subr.mxu0 0.0
        %612 = vmatpush1.msra.mxu0 0.0
        %613 = vmatprep.subr.mxu0 0.0
        %614 = vmatpush1.msra.mxu0 0.0
        %615 = vmatprep.subr.mxu0 0.0
        %616 = vmatpush1.msra.mxu0 0.0
        %617 = vmatprep.mubr.f32.mxu0 0.0
        %618 = vmatmul.mubr.f32.gmra.mrb[0].mxu0 %v514
        %v619 = vpop.f32.mrb[0].mxu0
        %v620 = vadd.f32 %v551, %v619
        %v621 = vpop.f32.mrb[0].mxu0
        %622 = vmatprep.mubr.f32.mxu0 0.0
        %623 = vmatmul.mubr.f32.gmra.mrb[0].mxu0 %v515
        %v624 = vpop.f32.mrb[0].mxu0
        %v625 = vadd.f32 %v551, %v624
        %v626 = vpop.f32.mrb[0].mxu0
        %627 = vmatprep.mubr.f32.mxu0 0.0
        %628 = vmatmul.mubr.f32.gmra.mrb[0].mxu0 %v516
        %v629 = vpop.f32.mrb[0].mxu0
        %v630 = vadd.f32 %v551, %v629
        %v631 = vpop.f32.mrb[0].mxu0
        %632 = vmatprep.mubr.f32.mxu0 0.0
        %633 = vmatmul.mubr.f32.gmra.mrb[0].mxu0 %v517
        %v634 = vpop.f32.mrb[0].mxu0
        %v635 = vadd.f32 %v551, %v634
        %v636 = vpop.f32.mrb[0].mxu0
        %637 = vmatprep.mubr.f32.mxu0 0.0
        %638 = vmatmul.mubr.f32.gmra.mrb[0].mxu0 %v518
        %v639 = vpop.f32.mrb[0].mxu0
        %v640 = vadd.f32 %v551, %v639
        %v641 = vpop.f32.mrb[0].mxu0
        %642 = vmatprep.mubr.f32.mxu0 0.0
        %643 = vmatmul.mubr.f32.gmra.mrb[0].mxu0 %v519
        %v644 = vpop.f32.mrb[0].mxu0
        %v645 = vadd.f32 %v551, %v644
        %v646 = vpop.f32.mrb[0].mxu0
        %647 = vmatprep.mubr.f32.mxu0 0.0
        %648 = vmatmul.mubr.f32.gmra.mrb[0].mxu0 %v520
        %v649 = vpop.f32.mrb[0].mxu0
        %v650 = vadd.f32 %v551, %v649
        %v651 = vpop.f32.mrb[0].mxu0
        %652 = vmatprep.mubr.f32.mxu0 0.0
        %653 = vmatmul.mubr.f32.gmra.mrb[0].mxu0 %v521
        %v654 = vpop.f32.mrb[0].mxu0
        %v655 = vadd.f32 %v551, %v654
        %v656 = vpop.f32.mrb[0].mxu0
        %657 = vmatprep.mubr.f32.mxu0 0.0
        %658 = vmatmul.mubr.f32.gmra.mrb[0].mxu0 %v522
        %v659 = vpop.f32.mrb[0].mxu0
        %v660 = vadd.f32 %v551, %v659
        %v661 = vpop.f32.mrb[0].mxu0
        %662 = vmatprep.mubr.f32.mxu0 0.0
        %663 = vmatmul.mubr.f32.gmra.mrb[0].mxu0 %v523
        %v664 = vpop.f32.mrb[0].mxu0
        %v665 = vadd.f32 %v551, %v664
        %v666 = vpop.f32.mrb[0].mxu0
        %667 = vmatprep.mubr.f32.mxu0 0.0
        %668 = vmatmul.mubr.f32.gmra.mrb[0].mxu0 %v524
        %v669 = vpop.f32.mrb[0].mxu0
        %v670 = vadd.f32 %v551, %v669
        %v671 = vpop.f32.mrb[0].mxu0
        %672 = vmatprep.mubr.f32.mxu0 0.0
        %673 = vmatmul.mubr.f32.gmra.mrb[0].mxu0 %v525
        %v674 = vpop.f32.mrb[0].mxu0
        %v675 = vadd.f32 %v551, %v674
        %v676 = vpop.f32.mrb[0].mxu0
        %677 = vmatprep.mubr.f32.mxu0 0.0
        %678 = vmatmul.mubr.f32.gmra.mrb[0].mxu0 %v526
        %v679 = vpop.f32.mrb[0].mxu0
        %v680 = vadd.f32 %v551, %v679
        %v681 = vpop.f32.mrb[0].mxu0
        %682 = vmatprep.mubr.f32.mxu0 0.0
        %683 = vmatmul.mubr.f32.gmra.mrb[0].mxu0 %v527
        %v684 = vpop.f32.mrb[0].mxu0
        %v685 = vadd.f32 %v551, %v684
        %v686 = vpop.f32.mrb[0].mxu0
        %687 = vmatprep.mubr.f32.mxu0 0.0
        %688 = vmatmul.mubr.f32.gmra.mrb[0].mxu0 %v528
        %v689 = vpop.f32.mrb[0].mxu0
        %v690 = vadd.f32 %v551, %v689
        %v691 = vpop.f32.mrb[0].mxu0
        %692 = vmatprep.mubr.f32.mxu0 0.0
        %693 = vmatmul.mubr.f32.gmra.mrb[0].mxu0 %v529
        %v694 = vpop.f32.mrb[0].mxu0
        %v695 = vadd.f32 %v551, %v694
        %v696 = vpop.f32.mrb[0].mxu0
        %697 = vdwg.mxu0
        %v698 = vmax.f32 %v620, 0.0
        %v699 = vmax.f32 %v625, 0.0
        %v700 = vmax.f32 %v630, 0.0
        %v701 = vmax.f32 %v635, 0.0
        %v702 = vmax.f32 %v640, 0.0
        %v703 = vmax.f32 %v645, 0.0
        %v704 = vmax.f32 %v650, 0.0
        %v705 = vmax.f32 %v655, 0.0
        %v706 = vmax.f32 %v660, 0.0
        %v707 = vmax.f32 %v665, 0.0
        %v708 = vmax.f32 %v670, 0.0
        %v709 = vmax.f32 %v675, 0.0
        %v710 = vmax.f32 %v680, 0.0
        %v711 = vmax.f32 %v685, 0.0
        %v712 = vmax.f32 %v690, 0.0
        %v713 = vmax.f32 %v695, 0.0
        %v714 = vld [vmem:[#allocation10] sm:$0xff]
        %v715 = vld [vmem:[#allocation10 + $0x8] sm:$0xff]
        %v716 = vld [vmem:[#allocation10 + $0x10] sm:$0xff]
        %v717 = vld [vmem:[#allocation10 + $0x18] sm:$0xff]
        %v718 = vld [vmem:[#allocation10 + $0x20] sm:$0xff]
        %v719 = vld [vmem:[#allocation10 + $0x28] sm:$0xff]
        %v720 = vld [vmem:[#allocation10 + $0x30] sm:$0xff]
        %v721 = vld [vmem:[#allocation10 + $0x38] sm:$0xff]
        %v722 = vld [vmem:[#allocation10 + $0x40] sm:$0xff]
        %v723 = vld [vmem:[#allocation10 + $0x48] sm:$0xff]
        %v724 = vld [vmem:[#allocation10 + $0x50] sm:$0xff]
        %v725 = vld [vmem:[#allocation10 + $0x58] sm:$0xff]
        %v726 = vld [vmem:[#allocation10 + $0x60] sm:$0xff]
        %v727 = vld [vmem:[#allocation10 + $0x68] sm:$0xff]
        %v728 = vld [vmem:[#allocation10 + $0x70] sm:$0xff]
        %v729 = vld [vmem:[#allocation10 + $0x78] sm:$0xff]
        %v730 = vld [vmem:[%s6] sm:$0x1]
        %v732 = vlaneseq
        %v733 = vshrl.u32 %v732, 7
        %v734 = vsub.s32 0, %v733
        %v735 = vrot.slane %v730, %v734
        %737 = vmatprep.subr.mxu0 0.0
        %738 = vmatpush1.msra.mxu0 %v714
        %739 = vmatprep.subr.mxu0 0.0
        %740 = vmatpush1.msra.mxu0 %v715
        %741 = vmatprep.subr.mxu0 0.0
        %742 = vmatpush1.msra.mxu0 %v716
        %743 = vmatprep.subr.mxu0 0.0
        %744 = vmatpush1.msra.mxu0 %v717
        %745 = vmatprep.subr.mxu0 0.0
        %746 = vmatpush1.msra.mxu0 %v718
        %747 = vmatprep.subr.mxu0 0.0
        %748 = vmatpush1.msra.mxu0 %v719
        %749 = vmatprep.subr.mxu0 0.0
        %750 = vmatpush1.msra.mxu0 %v720
        %751 = vmatprep.subr.mxu0 0.0
        %752 = vmatpush1.msra.mxu0 %v721
        %753 = vmatprep.subr.mxu0 0.0
        %754 = vmatpush1.msra.mxu0 %v722
        %755 = vmatprep.subr.mxu0 0.0
        %756 = vmatpush1.msra.mxu0 %v723
        %757 = vmatprep.subr.mxu0 0.0
        %758 = vmatpush1.msra.mxu0 %v724
        %759 = vmatprep.subr.mxu0 0.0
        %760 = vmatpush1.msra.mxu0 %v725
        %761 = vmatprep.subr.mxu0 0.0
        %762 = vmatpush1.msra.mxu0 %v726
        %763 = vmatprep.subr.mxu0 0.0
        %764 = vmatpush1.msra.mxu0 %v727
        %765 = vmatprep.subr.mxu0 0.0
        %766 = vmatpush1.msra.mxu0 %v728
        %767 = vmatprep.subr.mxu0 0.0
        %768 = vmatpush1.msra.mxu0 %v729
        %769 = vmatprep.subr.mxu0 0.0
        %770 = vmatpush1.msra.mxu0 0.0
        %771 = vmatprep.subr.mxu0 0.0
        %772 = vmatpush1.msra.mxu0 0.0
        %773 = vmatprep.subr.mxu0 0.0
        %774 = vmatpush1.msra.mxu0 0.0
        %775 = vmatprep.subr.mxu0 0.0
        %776 = vmatpush1.msra.mxu0 0.0
        %777 = vmatprep.subr.mxu0 0.0
        %778 = vmatpush1.msra.mxu0 0.0
        %779 = vmatprep.subr.mxu0 0.0
        %780 = vmatpush1.msra.mxu0 0.0
        %781 = vmatprep.subr.mxu0 0.0
        %782 = vmatpush1.msra.mxu0 0.0
        %783 = vmatprep.subr.mxu0 0.0
        %784 = vmatpush1.msra.mxu0 0.0
        %785 = vmatprep.subr.mxu0 0.0
        %786 = vmatpush1.msra.mxu0 0.0
        %787 = vmatprep.subr.mxu0 0.0
        %788 = vmatpush1.msra.mxu0 0.0
        %789 = vmatprep.subr.mxu0 0.0
        %790 = vmatpush1.msra.mxu0 0.0
        %791 = vmatprep.subr.mxu0 0.0
        %792 = vmatpush1.msra.mxu0 0.0
        %793 = vmatprep.subr.mxu0 0.0
        %794 = vmatpush1.msra.mxu0 0.0
        %795 = vmatprep.subr.mxu0 0.0
        %796 = vmatpush1.msra.mxu0 0.0
        %797 = vmatprep.subr.mxu0 0.0
        %798 = vmatpush1.msra.mxu0 0.0
        %799 = vmatprep.subr.mxu0 0.0
        %800 = vmatpush1.msra.mxu0 0.0
        %801 = vmatprep.mubr.f32.mxu0 0.0
        %802 = vmatmul.mubr.f32.gmra.mrb[0].mxu0 %v698
        %v803 = vpop.f32.mrb[0].mxu0
        %v804 = vadd.f32 %v735, %v803
        %v805 = vpop.f32.mrb[0].mxu0
        %806 = vmatprep.mubr.f32.mxu0 0.0
        %807 = vmatmul.mubr.f32.gmra.mrb[0].mxu0 %v699
        %v808 = vpop.f32.mrb[0].mxu0
        %v809 = vadd.f32 %v735, %v808
        %v810 = vpop.f32.mrb[0].mxu0
        %811 = vmatprep.mubr.f32.mxu0 0.0
        %812 = vmatmul.mubr.f32.gmra.mrb[0].mxu0 %v700
        %v813 = vpop.f32.mrb[0].mxu0
        %v814 = vadd.f32 %v735, %v813
        %v815 = vpop.f32.mrb[0].mxu0
        %816 = vmatprep.mubr.f32.mxu0 0.0
        %817 = vmatmul.mubr.f32.gmra.mrb[0].mxu0 %v701
        %v818 = vpop.f32.mrb[0].mxu0
        %v819 = vadd.f32 %v735, %v818
        %v820 = vpop.f32.mrb[0].mxu0
        %821 = vmatprep.mubr.f32.mxu0 0.0
        %822 = vmatmul.mubr.f32.gmra.mrb[0].mxu0 %v702
        %v823 = vpop.f32.mrb[0].mxu0
        %v824 = vadd.f32 %v735, %v823
        %v825 = vpop.f32.mrb[0].mxu0
        %826 = vmatprep.mubr.f32.mxu0 0.0
        %827 = vmatmul.mubr.f32.gmra.mrb[0].mxu0 %v703
        %v828 = vpop.f32.mrb[0].mxu0
        %v829 = vadd.f32 %v735, %v828
        %v830 = vpop.f32.mrb[0].mxu0
        %831 = vmatprep.mubr.f32.mxu0 0.0
        %832 = vmatmul.mubr.f32.gmra.mrb[0].mxu0 %v704
        %v833 = vpop.f32.mrb[0].mxu0
        %v834 = vadd.f32 %v735, %v833
        %v835 = vpop.f32.mrb[0].mxu0
        %836 = vmatprep.mubr.f32.mxu0 0.0
        %837 = vmatmul.mubr.f32.gmra.mrb[0].mxu0 %v705
        %v838 = vpop.f32.mrb[0].mxu0
        %v839 = vadd.f32 %v735, %v838
        %v840 = vpop.f32.mrb[0].mxu0
        %841 = vmatprep.mubr.f32.mxu0 0.0
        %842 = vmatmul.mubr.f32.gmra.mrb[0].mxu0 %v706
        %v843 = vpop.f32.mrb[0].mxu0
        %v844 = vadd.f32 %v735, %v843
        %v845 = vpop.f32.mrb[0].mxu0
        %846 = vmatprep.mubr.f32.mxu0 0.0
        %847 = vmatmul.mubr.f32.gmra.mrb[0].mxu0 %v707
        %v848 = vpop.f32.mrb[0].mxu0
        %v849 = vadd.f32 %v735, %v848
        %v850 = vpop.f32.mrb[0].mxu0
        %851 = vmatprep.mubr.f32.mxu0 0.0
        %852 = vmatmul.mubr.f32.gmra.mrb[0].mxu0 %v708
        %v853 = vpop.f32.mrb[0].mxu0
        %v854 = vadd.f32 %v735, %v853
        %v855 = vpop.f32.mrb[0].mxu0
        %856 = vmatprep.mubr.f32.mxu0 0.0
        %857 = vmatmul.mubr.f32.gmra.mrb[0].mxu0 %v709
        %v858 = vpop.f32.mrb[0].mxu0
        %v859 = vadd.f32 %v735, %v858
        %v860 = vpop.f32.mrb[0].mxu0
        %861 = vmatprep.mubr.f32.mxu0 0.0
        %862 = vmatmul.mubr.f32.gmra.mrb[0].mxu0 %v710
        %v863 = vpop.f32.mrb[0].mxu0
        %v864 = vadd.f32 %v735, %v863
        %v865 = vpop.f32.mrb[0].mxu0
        %866 = vmatprep.mubr.f32.mxu0 0.0
        %867 = vmatmul.mubr.f32.gmra.mrb[0].mxu0 %v711
        %v868 = vpop.f32.mrb[0].mxu0
        %v869 = vadd.f32 %v735, %v868
        %v870 = vpop.f32.mrb[0].mxu0
        %871 = vmatprep.mubr.f32.mxu0 0.0
        %872 = vmatmul.mubr.f32.gmra.mrb[0].mxu0 %v712
        %v873 = vpop.f32.mrb[0].mxu0
        %v874 = vadd.f32 %v735, %v873
        %v875 = vpop.f32.mrb[0].mxu0
        %876 = vmatprep.mubr.f32.mxu0 0.0
        %877 = vmatmul.mubr.f32.gmra.mrb[0].mxu0 %v713
        %v878 = vpop.f32.mrb[0].mxu0
        %v879 = vadd.f32 %v735, %v878
        %v880 = vpop.f32.mrb[0].mxu0
        %881 = vdwg.mxu0
        %v882 = vmax.f32 %v804, 0.0
        %v883 = vmax.f32 %v809, 0.0
        %v884 = vmax.f32 %v814, 0.0
        %v885 = vmax.f32 %v819, 0.0
        %v886 = vmax.f32 %v824, 0.0
        %v887 = vmax.f32 %v829, 0.0
        %v888 = vmax.f32 %v834, 0.0
        %v889 = vmax.f32 %v839, 0.0
        %v890 = vmax.f32 %v844, 0.0
        %v891 = vmax.f32 %v849, 0.0
        %v892 = vmax.f32 %v854, 0.0
        %v893 = vmax.f32 %v859, 0.0
        %v894 = vmax.f32 %v864, 0.0
        %v895 = vmax.f32 %v869, 0.0
        %v896 = vmax.f32 %v874, 0.0
        %v897 = vmax.f32 %v879, 0.0
        %v898 = vld [vmem:[#allocation11] sm:$0xff]
        %v899 = vld [vmem:[#allocation11 + $0x8] sm:$0xff]
        %v900 = vld [vmem:[#allocation11 + $0x10] sm:$0xff]
        %v901 = vld [vmem:[#allocation11 + $0x18] sm:$0xff]
        %v902 = vld [vmem:[#allocation11 + $0x20] sm:$0xff]
        %v903 = vld [vmem:[#allocation11 + $0x28] sm:$0xff]
        %v904 = vld [vmem:[#allocation11 + $0x30] sm:$0xff]
        %v905 = vld [vmem:[#allocation11 + $0x38] sm:$0xff]
        %v906 = vld [vmem:[#allocation11 + $0x40] sm:$0xff]
        %v907 = vld [vmem:[#allocation11 + $0x48] sm:$0xff]
        %v908 = vld [vmem:[#allocation11 + $0x50] sm:$0xff]
        %v909 = vld [vmem:[#allocation11 + $0x58] sm:$0xff]
        %v910 = vld [vmem:[#allocation11 + $0x60] sm:$0xff]
        %v911 = vld [vmem:[#allocation11 + $0x68] sm:$0xff]
        %v912 = vld [vmem:[#allocation11 + $0x70] sm:$0xff]
        %v913 = vld [vmem:[#allocation11 + $0x78] sm:$0xff]
        %v914 = vld [vmem:[%s8] sm:$0x1]
        %v916 = vlaneseq
        %v917 = vshrl.u32 %v916, 7
        %v918 = vsub.s32 0, %v917
        %v919 = vrot.slane %v914, %v918
        %921 = vmatprep.subr.mxu0 0.0
        %922 = vmatpush1.msra.mxu0 %v898
        %923 = vmatprep.subr.mxu0 0.0
        %924 = vmatpush1.msra.mxu0 %v899
        %925 = vmatprep.subr.mxu0 0.0
        %926 = vmatpush1.msra.mxu0 %v900
        %927 = vmatprep.subr.mxu0 0.0
        %928 = vmatpush1.msra.mxu0 %v901
        %929 = vmatprep.subr.mxu0 0.0
        %930 = vmatpush1.msra.mxu0 %v902
        %931 = vmatprep.subr.mxu0 0.0
        %932 = vmatpush1.msra.mxu0 %v903
        %933 = vmatprep.subr.mxu0 0.0
        %934 = vmatpush1.msra.mxu0 %v904
        %935 = vmatprep.subr.mxu0 0.0
        %936 = vmatpush1.msra.mxu0 %v905
        %937 = vmatprep.subr.mxu0 0.0
        %938 = vmatpush1.msra.mxu0 %v906
        %939 = vmatprep.subr.mxu0 0.0
        %940 = vmatpush1.msra.mxu0 %v907
        %941 = vmatprep.subr.mxu0 0.0
        %942 = vmatpush1.msra.mxu0 %v908
        %943 = vmatprep.subr.mxu0 0.0
        %944 = vmatpush1.msra.mxu0 %v909
        %945 = vmatprep.subr.mxu0 0.0
        %946 = vmatpush1.msra.mxu0 %v910
        %947 = vmatprep.subr.mxu0 0.0
        %948 = vmatpush1.msra.mxu0 %v911
        %949 = vmatprep.subr.mxu0 0.0
        %950 = vmatpush1.msra.mxu0 %v912
        %951 = vmatprep.subr.mxu0 0.0
        %952 = vmatpush1.msra.mxu0 %v913
        %953 = vmatprep.subr.mxu0 0.0
        %954 = vmatpush1.msra.mxu0 0.0
        %955 = vmatprep.subr.mxu0 0.0
        %956 = vmatpush1.msra.mxu0 0.0
        %957 = vmatprep.subr.mxu0 0.0
        %958 = vmatpush1.msra.mxu0 0.0
        %959 = vmatprep.subr.mxu0 0.0
        %960 = vmatpush1.msra.mxu0 0.0
        %961 = vmatprep.subr.mxu0 0.0
        %962 = vmatpush1.msra.mxu0 0.0
        %963 = vmatprep.subr.mxu0 0.0
        %964 = vmatpush1.msra.mxu0 0.0
        %965 = vmatprep.subr.mxu0 0.0
        %966 = vmatpush1.msra.mxu0 0.0
        %967 = vmatprep.subr.mxu0 0.0
        %968 = vmatpush1.msra.mxu0 0.0
        %969 = vmatprep.subr.mxu0 0.0
        %970 = vmatpush1.msra.mxu0 0.0
        %971 = vmatprep.subr.mxu0 0.0
        %972 = vmatpush1.msra.mxu0 0.0
        %973 = vmatprep.subr.mxu0 0.0
        %974 = vmatpush1.msra.mxu0 0.0
        %975 = vmatprep.subr.mxu0 0.0
        %976 = vmatpush1.msra.mxu0 0.0
        %977 = vmatprep.subr.mxu0 0.0
        %978 = vmatpush1.msra.mxu0 0.0
        %979 = vmatprep.subr.mxu0 0.0
        %980 = vmatpush1.msra.mxu0 0.0
        %981 = vmatprep.subr.mxu0 0.0
        %982 = vmatpush1.msra.mxu0 0.0
        %983 = vmatprep.subr.mxu0 0.0
        %984 = vmatpush1.msra.mxu0 0.0
        %985 = vmatprep.mubr.f32.mxu0 0.0
        %986 = vmatmul.mubr.f32.gmra.mrb[0].mxu0 %v882
        %v987 = vpop.f32.mrb[0].mxu0
        %v988 = vadd.f32 %v919, %v987
        %v989 = vpop.f32.mrb[0].mxu0
        %990 = vmatprep.mubr.f32.mxu0 0.0
        %991 = vmatmul.mubr.f32.gmra.mrb[0].mxu0 %v883
        %v992 = vpop.f32.mrb[0].mxu0
        %v993 = vadd.f32 %v919, %v992
        %v994 = vpop.f32.mrb[0].mxu0
        %995 = vmatprep.mubr.f32.mxu0 0.0
        %996 = vmatmul.mubr.f32.gmra.mrb[0].mxu0 %v884
        %v997 = vpop.f32.mrb[0].mxu0
        %v998 = vadd.f32 %v919, %v997
        %v999 = vpop.f32.mrb[0].mxu0
        %1000 = vmatprep.mubr.f32.mxu0 0.0
        %1001 = vmatmul.mubr.f32.gmra.mrb[0].mxu0 %v885
        %v1002 = vpop.f32.mrb[0].mxu0
        %v1003 = vadd.f32 %v919, %v1002
        %v1004 = vpop.f32.mrb[0].mxu0
        %1005 = vmatprep.mubr.f32.mxu0 0.0
        %1006 = vmatmul.mubr.f32.gmra.mrb[0].mxu0 %v886
        %v1007 = vpop.f32.mrb[0].mxu0
        %v1008 = vadd.f32 %v919, %v1007
        %v1009 = vpop.f32.mrb[0].mxu0
        %1010 = vmatprep.mubr.f32.mxu0 0.0
        %1011 = vmatmul.mubr.f32.gmra.mrb[0].mxu0 %v887
        %v1012 = vpop.f32.mrb[0].mxu0
        %v1013 = vadd.f32 %v919, %v1012
        %v1014 = vpop.f32.mrb[0].mxu0
        %1015 = vmatprep.mubr.f32.mxu0 0.0
        %1016 = vmatmul.mubr.f32.gmra.mrb[0].mxu0 %v888
        %v1017 = vpop.f32.mrb[0].mxu0
        %v1018 = vadd.f32 %v919, %v1017
        %v1019 = vpop.f32.mrb[0].mxu0
        %1020 = vmatprep.mubr.f32.mxu0 0.0
        %1021 = vmatmul.mubr.f32.gmra.mrb[0].mxu0 %v889
        %v1022 = vpop.f32.mrb[0].mxu0
        %v1023 = vadd.f32 %v919, %v1022
        %v1024 = vpop.f32.mrb[0].mxu0
        %1025 = vmatprep.mubr.f32.mxu0 0.0
        %1026 = vmatmul.mubr.f32.gmra.mrb[0].mxu0 %v890
        %v1027 = vpop.f32.mrb[0].mxu0
        %v1028 = vadd.f32 %v919, %v1027
        %v1029 = vpop.f32.mrb[0].mxu0
        %1030 = vmatprep.mubr.f32.mxu0 0.0
        %1031 = vmatmul.mubr.f32.gmra.mrb[0].mxu0 %v891
        %v1032 = vpop.f32.mrb[0].mxu0
        %v1033 = vadd.f32 %v919, %v1032
        %v1034 = vpop.f32.mrb[0].mxu0
        %1035 = vmatprep.mubr.f32.mxu0 0.0
        %1036 = vmatmul.mubr.f32.gmra.mrb[0].mxu0 %v892
        %v1037 = vpop.f32.mrb[0].mxu0
        %v1038 = vadd.f32 %v919, %v1037
        %v1039 = vpop.f32.mrb[0].mxu0
        %1040 = vmatprep.mubr.f32.mxu0 0.0
        %1041 = vmatmul.mubr.f32.gmra.mrb[0].mxu0 %v893
        %v1042 = vpop.f32.mrb[0].mxu0
        %v1043 = vadd.f32 %v919, %v1042
        %v1044 = vpop.f32.mrb[0].mxu0
        %1045 = vmatprep.mubr.f32.mxu0 0.0
        %1046 = vmatmul.mubr.f32.gmra.mrb[0].mxu0 %v894
        %v1047 = vpop.f32.mrb[0].mxu0
        %v1048 = vadd.f32 %v919, %v1047
        %v1049 = vpop.f32.mrb[0].mxu0
        %1050 = vmatprep.mubr.f32.mxu0 0.0
        %1051 = vmatmul.mubr.f32.gmra.mrb[0].mxu0 %v895
        %v1052 = vpop.f32.mrb[0].mxu0
        %v1053 = vadd.f32 %v919, %v1052
        %v1054 = vpop.f32.mrb[0].mxu0
        %1055 = vmatprep.mubr.f32.mxu0 0.0
        %1056 = vmatmul.mubr.f32.gmra.mrb[0].mxu0 %v896
        %v1057 = vpop.f32.mrb[0].mxu0
        %v1058 = vadd.f32 %v919, %v1057
        %v1059 = vpop.f32.mrb[0].mxu0
        %1060 = vmatprep.mubr.f32.mxu0 0.0
        %1061 = vmatmul.mubr.f32.gmra.mrb[0].mxu0 %v897
        %v1062 = vpop.f32.mrb[0].mxu0
        %v1063 = vadd.f32 %v919, %v1062
        %v1064 = vpop.f32.mrb[0].mxu0
        %1065 = vdwg.mxu0
        %1066 = vst [vmem:[%s502] sm:$0xff] %v988
        %1067 = vst [vmem:[%s502 + $0x8] sm:$0xff] %v993
        %1068 = vst [vmem:[%s502 + $0x10] sm:$0xff] %v998
        %1069 = vst [vmem:[%s502 + $0x18] sm:$0xff] %v1003
        %1070 = vst [vmem:[%s502 + $0x20] sm:$0xff] %v1008
        %1071 = vst [vmem:[%s502 + $0x28] sm:$0xff] %v1013
        %1072 = vst [vmem:[%s502 + $0x30] sm:$0xff] %v1018
        %1073 = vst [vmem:[%s502 + $0x38] sm:$0xff] %v1023
        %1074 = vst [vmem:[%s502 + $0x40] sm:$0xff] %v1028
        %1075 = vst [vmem:[%s502 + $0x48] sm:$0xff] %v1033
        %1076 = vst [vmem:[%s502 + $0x50] sm:$0xff] %v1038
        %1077 = vst [vmem:[%s502 + $0x58] sm:$0xff] %v1043
        %1078 = vst [vmem:[%s502 + $0x60] sm:$0xff] %v1048
        %1079 = vst [vmem:[%s502 + $0x68] sm:$0xff] %v1053
        %1080 = vst [vmem:[%s502 + $0x70] sm:$0xff] %v1058
        %1081 = vst [vmem:[%s502 + $0x78] sm:$0xff] %v1063
        %v1082 = vld [vmem:[%s437] sm:$0xff]
        %v1083 = vld [vmem:[%s437 + $0x8] sm:$0xff]
        %v1084 = vld [vmem:[%s437 + $0x10] sm:$0xff]
        %v1085 = vld [vmem:[%s437 + $0x18] sm:$0xff]
        %v1086 = vld [vmem:[%s437 + $0x20] sm:$0xff]
        %v1087 = vld [vmem:[%s437 + $0x28] sm:$0xff]
        %v1088 = vld [vmem:[%s437 + $0x30] sm:$0xff]
        %v1089 = vld [vmem:[%s437 + $0x38] sm:$0xff]
        %v1090 = vld [vmem:[%s437 + $0x40] sm:$0xff]
        %v1091 = vld [vmem:[%s437 + $0x48] sm:$0xff]
        %v1092 = vld [vmem:[%s437 + $0x50] sm:$0xff]
        %v1093 = vld [vmem:[%s437 + $0x58] sm:$0xff]
        %v1094 = vld [vmem:[%s437 + $0x60] sm:$0xff]
        %v1095 = vld [vmem:[%s437 + $0x68] sm:$0xff]
        %v1096 = vld [vmem:[%s437 + $0x70] sm:$0xff]
        %v1097 = vld [vmem:[%s437 + $0x78] sm:$0xff]
        %v1098 = vmax.f32 %v988, 0.0
        %v1099 = vmax.f32 %v993, 0.0
        %v1100 = vmax.f32 %v998, 0.0
        %v1101 = vmax.f32 %v1003, 0.0
        %v1102 = vmax.f32 %v1008, 0.0
        %v1103 = vmax.f32 %v1013, 0.0
        %v1104 = vmax.f32 %v1018, 0.0
        %v1105 = vmax.f32 %v1023, 0.0
        %v1106 = vmax.f32 %v1028, 0.0
        %v1107 = vmax.f32 %v1033, 0.0
        %v1108 = vmax.f32 %v1038, 0.0
        %v1109 = vmax.f32 %v1043, 0.0
        %v1110 = vmax.f32 %v1048, 0.0
        %v1111 = vmax.f32 %v1053, 0.0
        %v1112 = vmax.f32 %v1058, 0.0
        %v1113 = vmax.f32 %v1063, 0.0
        %v1114 = vmul.f32 %v988, %v1082
        %v1115 = vmul.f32 %v993, %v1083
        %v1116 = vmul.f32 %v998, %v1084
        %v1117 = vmul.f32 %v1003, %v1085
        %v1118 = vmul.f32 %v1008, %v1086
        %v1119 = vmul.f32 %v1013, %v1087
        %v1120 = vmul.f32 %v1018, %v1088
        %v1121 = vmul.f32 %v1023, %v1089
        %v1122 = vmul.f32 %v1028, %v1090
        %v1123 = vmul.f32 %v1033, %v1091
        %v1124 = vmul.f32 %v1038, %v1092
        %v1125 = vmul.f32 %v1043, %v1093
        %v1126 = vmul.f32 %v1048, %v1094
        %v1127 = vmul.f32 %v1053, %v1095
        %v1128 = vmul.f32 %v1058, %v1096
        %v1129 = vmul.f32 %v1063, %v1097
        %v1130 = vsub.f32 %v1098, %v1114
        %v1131 = vsub.f32 %v1099, %v1115
        %v1132 = vsub.f32 %v1100, %v1116
        %v1133 = vsub.f32 %v1101, %v1117
        %v1134 = vsub.f32 %v1102, %v1118
        %v1135 = vsub.f32 %v1103, %v1119
        %v1136 = vsub.f32 %v1104, %v1120
        %v1137 = vsub.f32 %v1105, %v1121
        %v1138 = vsub.f32 %v1106, %v1122
        %v1139 = vsub.f32 %v1107, %v1123
        %v1140 = vsub.f32 %v1108, %v1124
        %v1141 = vsub.f32 %v1109, %v1125
        %v1142 = vsub.f32 %v1110, %v1126
        %v1143 = vsub.f32 %v1111, %v1127
        %v1144 = vsub.f32 %v1112, %v1128
        %v1145 = vsub.f32 %v1113, %v1129
        %v1146 = vand.u32 2147483647, %v988
        %v1147 = vand.u32 2147483647, %v993
        %v1148 = vand.u32 2147483647, %v998
        %v1149 = vand.u32 2147483647, %v1003
        %v1150 = vand.u32 2147483647, %v1008
        %v1151 = vand.u32 2147483647, %v1013
        %v1152 = vand.u32 2147483647, %v1018
        %v1153 = vand.u32 2147483647, %v1023
        %v1154 = vand.u32 2147483647, %v1028
        %v1155 = vand.u32 2147483647, %v1033
        %v1156 = vand.u32 2147483647, %v1038
        %v1157 = vand.u32 2147483647, %v1043
        %v1158 = vand.u32 2147483647, %v1048
        %v1159 = vand.u32 2147483647, %v1053
        %v1160 = vand.u32 2147483647, %v1058
        %v1161 = vand.u32 2147483647, %v1063
        %v1162 = vsub.f32 0.0, %v1146
        %v1163 = vsub.f32 0.0, %v1147
        %v1164 = vsub.f32 0.0, %v1148
        %v1165 = vsub.f32 0.0, %v1149
        %v1166 = vsub.f32 0.0, %v1150
        %v1167 = vsub.f32 0.0, %v1151
        %v1168 = vsub.f32 0.0, %v1152
        %v1169 = vsub.f32 0.0, %v1153
        %v1170 = vsub.f32 0.0, %v1154
        %v1171 = vsub.f32 0.0, %v1155
        %v1172 = vsub.f32 0.0, %v1156
        %v1173 = vsub.f32 0.0, %v1157
        %v1174 = vsub.f32 0.0, %v1158
        %v1175 = vsub.f32 0.0, %v1159
        %v1176 = vsub.f32 0.0, %v1160
        %v1177 = vsub.f32 0.0, %v1161
        %v1178 = vmul.f32 %v1162, 1.442695
        %v1179 = vpow.pop %v1178
        %v1180 = vmul.f32 %v1163, 1.442695
        %v1181 = vpow.pop %v1180
        %v1182 = vmul.f32 %v1164, 1.442695
        %v1183 = vpow.pop %v1182
        %v1184 = vmul.f32 %v1165, 1.442695
        %v1185 = vpow.pop %v1184
        %v1186 = vmul.f32 %v1166, 1.442695
        %v1187 = vpow.pop %v1186
        %v1188 = vmul.f32 %v1167, 1.442695
        %v1189 = vpow.pop %v1188
        %v1190 = vmul.f32 %v1168, 1.442695
        %v1191 = vpow.pop %v1190
        %v1192 = vmul.f32 %v1169, 1.442695
        %v1193 = vpow.pop %v1192
        %v1194 = vmul.f32 %v1170, 1.442695
        %v1195 = vpow.pop %v1194
        %v1196 = vmul.f32 %v1171, 1.442695
        %v1197 = vpow.pop %v1196
        %v1198 = vmul.f32 %v1172, 1.442695
        %v1199 = vpow.pop %v1198
        %v1200 = vmul.f32 %v1173, 1.442695
        %v1201 = vpow.pop %v1200
        %v1202 = vmul.f32 %v1174, 1.442695
        %v1203 = vpow.pop %v1202
        %v1204 = vmul.f32 %v1175, 1.442695
        %v1205 = vpow.pop %v1204
        %v1206 = vmul.f32 %v1176, 1.442695
        %v1207 = vpow.pop %v1206
        %v1208 = vmul.f32 %v1177, 1.442695
        %v1209 = vpow.pop %v1208
        %v1210 = vadd.f32 %v1179, 1.0
        %v1211 = vadd.f32 %v1181, 1.0
        %v1212 = vadd.f32 %v1183, 1.0
        %v1213 = vadd.f32 %v1185, 1.0
        %v1214 = vadd.f32 %v1187, 1.0
        %v1215 = vadd.f32 %v1189, 1.0
        %v1216 = vadd.f32 %v1191, 1.0
        %v1217 = vadd.f32 %v1193, 1.0
        %v1218 = vadd.f32 %v1195, 1.0
        %v1219 = vadd.f32 %v1197, 1.0
        %v1220 = vadd.f32 %v1199, 1.0
        %v1221 = vadd.f32 %v1201, 1.0
        %v1222 = vadd.f32 %v1203, 1.0
        %v1223 = vadd.f32 %v1205, 1.0
        %v1224 = vadd.f32 %v1207, 1.0
        %v1225 = vadd.f32 %v1209, 1.0
        %v1226 = vlog2.pop %v1210
        %v1227 = vmul.f32 %v1226, 0.6931472
        %v1228 = vlog2.pop %v1211
        %v1229 = vmul.f32 %v1228, 0.6931472
        %v1230 = vlog2.pop %v1212
        %v1231 = vmul.f32 %v1230, 0.6931472
        %v1232 = vlog2.pop %v1213
        %v1233 = vmul.f32 %v1232, 0.6931472
        %v1234 = vlog2.pop %v1214
        %v1235 = vmul.f32 %v1234, 0.6931472
        %v1236 = vlog2.pop %v1215
        %v1237 = vmul.f32 %v1236, 0.6931472
        %v1238 = vlog2.pop %v1216
        %v1239 = vmul.f32 %v1238, 0.6931472
        %v1240 = vlog2.pop %v1217
        %v1241 = vmul.f32 %v1240, 0.6931472
        %v1242 = vlog2.pop %v1218
        %v1243 = vmul.f32 %v1242, 0.6931472
        %v1244 = vlog2.pop %v1219
        %v1245 = vmul.f32 %v1244, 0.6931472
        %v1246 = vlog2.pop %v1220
        %v1247 = vmul.f32 %v1246, 0.6931472
        %v1248 = vlog2.pop %v1221
        %v1249 = vmul.f32 %v1248, 0.6931472
        %v1250 = vlog2.pop %v1222
        %v1251 = vmul.f32 %v1250, 0.6931472
        %v1252 = vlog2.pop %v1223
        %v1253 = vmul.f32 %v1252, 0.6931472
        %v1254 = vlog2.pop %v1224
        %v1255 = vmul.f32 %v1254, 0.6931472
        %v1256 = vlog2.pop %v1225
        %v1257 = vmul.f32 %v1256, 0.6931472
        %v1258 = vadd.f32 %v1130, %v1227
        %v1259 = vadd.f32 %v1131, %v1229
        %v1260 = vadd.f32 %v1132, %v1231
        %v1261 = vadd.f32 %v1133, %v1233
        %v1262 = vadd.f32 %v1134, %v1235
        %v1263 = vadd.f32 %v1135, %v1237
        %v1264 = vadd.f32 %v1136, %v1239
        %v1265 = vadd.f32 %v1137, %v1241
        %v1266 = vadd.f32 %v1138, %v1243
        %v1267 = vadd.f32 %v1139, %v1245
        %v1268 = vadd.f32 %v1140, %v1247
        %v1269 = vadd.f32 %v1141, %v1249
        %v1270 = vadd.f32 %v1142, %v1251
        %v1271 = vadd.f32 %v1143, %v1253
        %v1272 = vadd.f32 %v1144, %v1255
        %v1273 = vadd.f32 %v1145, %v1257
        %v1274 = vld [vmem:[%s446] sm:$0xff]
        %v1275 = vld [vmem:[%s446 + $0x8] sm:$0xff]
        %v1276 = vld [vmem:[%s446 + $0x10] sm:$0xff]
        %v1277 = vld [vmem:[%s446 + $0x18] sm:$0xff]
        %v1278 = vld [vmem:[%s446 + $0x20] sm:$0xff]
        %v1279 = vld [vmem:[%s446 + $0x28] sm:$0xff]
        %v1280 = vld [vmem:[%s446 + $0x30] sm:$0xff]
        %v1281 = vld [vmem:[%s446 + $0x38] sm:$0xff]
        %v1282 = vld [vmem:[%s446 + $0x40] sm:$0xff]
        %v1283 = vld [vmem:[%s446 + $0x48] sm:$0xff]
        %v1284 = vld [vmem:[%s446 + $0x50] sm:$0xff]
        %v1285 = vld [vmem:[%s446 + $0x58] sm:$0xff]
        %v1286 = vld [vmem:[%s446 + $0x60] sm:$0xff]
        %v1287 = vld [vmem:[%s446 + $0x68] sm:$0xff]
        %v1288 = vld [vmem:[%s446 + $0x70] sm:$0xff]
        %v1289 = vld [vmem:[%s446 + $0x78] sm:$0xff]
        %v1290 = vmul.f32 %v1258, %v1274
        %v1291 = vmul.f32 %v1259, %v1275
        %v1292 = vmul.f32 %v1260, %v1276
        %v1293 = vmul.f32 %v1261, %v1277
        %v1294 = vmul.f32 %v1262, %v1278
        %v1295 = vmul.f32 %v1263, %v1279
        %v1296 = vmul.f32 %v1264, %v1280
        %v1297 = vmul.f32 %v1265, %v1281
        %v1298 = vmul.f32 %v1266, %v1282
        %v1299 = vmul.f32 %v1267, %v1283
        %v1300 = vmul.f32 %v1268, %v1284
        %v1301 = vmul.f32 %v1269, %v1285
        %v1302 = vmul.f32 %v1270, %v1286
        %v1303 = vmul.f32 %v1271, %v1287
        %v1304 = vmul.f32 %v1272, %v1288
        %v1305 = vmul.f32 %v1273, %v1289
        %v1306 = vadd.f32 %v1290, %v1291
        %v1307 = vadd.f32 %v1306, %v1292
        %v1308 = vadd.f32 %v1307, %v1293
        %v1309 = vadd.f32 %v1308, %v1294
        %v1310 = vadd.f32 %v1309, %v1295
        %v1311 = vadd.f32 %v1310, %v1296
        %v1312 = vadd.f32 %v1311, %v1297
        %v1313 = vadd.f32 %v1312, %v1298
        %v1314 = vadd.f32 %v1313, %v1299
        %v1315 = vadd.f32 %v1314, %v1300
        %v1316 = vadd.f32 %v1315, %v1301
        %v1317 = vadd.f32 %v1316, %v1302
        %v1318 = vadd.f32 %v1317, %v1303
        %v1319 = vadd.f32 %v1318, %v1304
        %v1320 = vadd.f32 %v1319, %v1305
        %v1321 = vrot.slane %v1320, 4
        %v1322 = vadd.f32 %v1320, %v1321
        %v1323 = vrot.slane %v1322, 2
        %v1324 = vadd.f32 %v1322, %v1323
        %v1325 = vrot.slane %v1324, 1
        %v1326 = vadd.f32 %v1324, %v1325
        %1327 = vst [vmem:[%s509] sm:$0xff] %v1326
        %s1328 = sand.u32 %s248, 1
        %s1329 = scalar_lea.sflag [#allocation4], %s1328
        %s1330 = sand.u32 %s248, 1
        %s1331 = smul.addr %s1330, 128
        %s1332 = scalar_lea.vmem [#allocation13], %s1331
        %s1333 = sand.u32 %s274, 1
        %s1334 = scalar_lea.sflag [#allocation15], %s1333
        %s1335 = sand.u32 %s274, 1
        %s1336 = smul.addr %s1335, 8
        %s1337 = scalar_lea.vmem [#allocation14], %s1336
        // Predicated region
        $region81: #{tpu_custom_call.1} parent=55 // pred_check
          %p1338 = pneg %p258
        $region82: #{tpu_custom_call.1} parent=55 // pred_check_branch
          %1340 = sbr.rel (%p1338) target = $region84
        $region83: #{tpu_custom_call.1} parent=55 // pred_region
          %s1341 = smul.u32 16, %s36
          %s1343 = ssub.s32 2048, 2048
          %1344 = vsyncadd %s1329, %s1343
          %s1345 = smul.addr %s1341, 128
          %s1346 = scalar_lea.hbm %s9, %s1345
          %s1347 = sshll.u32 %s1332, 4
          %s1348 = int_to_ptr.vmem [resolvable:$true] %s1347
          %1353 = dma.vmem_to_hbm [thread:$0]  %s1348, 2048, %s1346, %s1329, 128, 128, 8
        $region84: #{tpu_custom_call.1} parent=55 // pred_fallthru
          _
        // Predicated region
        $region85: #{tpu_custom_call.1} parent=55 // pred_check
          %p1354 = pneg %p284
        $region86: #{tpu_custom_call.1} parent=55 // pred_check_branch
          %1356 = sbr.rel (%p1354) target = $region88
        $region87: #{tpu_custom_call.1} parent=55 // pred_region
          %s1358 = ssub.s32 128, 128
          %1359 = vsyncadd %s1334, %s1358
          %s1360 = smul.addr %s36, 128
          %s1361 = scalar_lea.hbm %s10, %s1360
          %s1363 = sshll.u32 %s1337, 4
          %s1364 = int_to_ptr.vmem [resolvable:$true] %s1363
          %1366 = dma.vmem_to_hbm [thread:$0]  %s1364, 128, %s1361, %s1334
        $region88: #{tpu_custom_call.1} parent=55 // pred_fallthru
          _
      $region56: #{tpu_custom_call.1} parent=5 // pred_fallthru
        _
      %p1367 = scmp.le.s32.totalorder 2, %s31
      // Predicated region
      $region89: #{tpu_custom_call.1} parent=5 // pred_check
        %p1368 = pneg %p1367
      $region90: #{tpu_custom_call.1} parent=5 // pred_check_branch
        %1370 = sbr.rel (%p1368) target = $region92
      $region91: #{tpu_custom_call.1} parent=5 // pred_region
        %s1371 = ssub.s32 %s31, 2
        // Predicated region
        $region93: #{tpu_custom_call.1} parent=91 // pred_check
          %p1372 = pneg %p264
        $region94: #{tpu_custom_call.1} parent=91 // pred_check_branch
          %1374 = sbr.rel (%p1372) target = $region96
        $region95: #{tpu_custom_call.1} parent=91 // pred_region
          %s1375 = sand.u32 %s249, 1
          %s1376 = scalar_lea.sflag [#allocation4], %s1375
          %s1377 = sand.u32 %s249, 1
          %s1378 = smul.addr %s1377, 128
          %s1379 = scalar_lea.vmem [#allocation13], %s1378
          %1380 = dma.done %s1376, 2048
        $region96: #{tpu_custom_call.1} parent=91 // pred_fallthru
          _
        // Predicated region
        $region97: #{tpu_custom_call.1} parent=91 // pred_check
          %p1381 = pneg %p290
        $region98: #{tpu_custom_call.1} parent=91 // pred_check_branch
          %1383 = sbr.rel (%p1381) target = $region100
        $region99: #{tpu_custom_call.1} parent=91 // pred_region
          %s1384 = sand.u32 %s275, 1
          %s1385 = scalar_lea.sflag [#allocation15], %s1384
          %s1386 = sand.u32 %s275, 1
          %s1387 = smul.addr %s1386, 8
          %s1388 = scalar_lea.vmem [#allocation14], %s1387
          %1389 = dma.done %s1385, 128
        $region100: #{tpu_custom_call.1} parent=91 // pred_fallthru
          _
      $region92: #{tpu_custom_call.1} parent=5 // pred_fallthru
        _
    $region6: #{tpu_custom_call.1} parent=1 // loop_footer
      %s35 = sadd.s32 1, %s31
    $region7: #{tpu_custom_call.1} parent=1 // loop_footer_branch
      %30 = sbr.rel target = $region3
    $region8: #{tpu_custom_call.1} parent=1 // loop_exit
      _
    %1390 = vsyncpa [#allocation3], 1
    %s1391 = scalar_lea.sflag [#allocation3], 1
    %1392 = vsyncpa %s1391, 1
    %1393 = vsyncpa [#allocation6], 1
    %s1394 = scalar_lea.sflag [#allocation6], 1
    %1395 = vsyncpa %s1394, 1
    %1396 = vsyncpa [#allocation9], 1
    %1397 = vsyncpa [#allocation12], 1
    %1398 = vsyncpa [#allocation4], 1
    %s1399 = scalar_lea.sflag [#allocation4], 1
    %1400 = vsyncpa %s1399, 1
    %1401 = vsyncpa [#allocation15], 1
    %s1402 = scalar_lea.sflag [#allocation15], 1
    %1403 = vsyncpa %s1402, 1

</llo_original>
